<compile_context>
chip_gen: v7x
topology: tpu7x:2x2x1
jax: 0.10.0
libtpu: 0.0.40
codegen_flags: <defaults>
</compile_context>

<pallas_src>
import jax
import jax.numpy as jnp
from jax.experimental import pallas as pl
from jax.experimental.pallas import tpu as pltpu


def _lstm_fc2_kernel(*refs):
    # refs = (x_slab, x_tail, w_fc2_h, w_fc2_x, b_fc2,
    #         [w_ih_fused, w_hh_fused, b_fused] per layer, out_ref)
    x_ref, xtail_ref, wfc2h_ref, wfc2x_ref, bfc2_ref = refs[:5]
    o_ref = refs[-1]
    layer_refs = refs[5:-1]
    num_layers = len(layer_refs) // 3

    H = wfc2h_ref.shape[0]
    Bp = o_ref.shape[0]                 # sublane-padded batch
    TB = x_ref.shape[0]
    T = TB // Bp                        # 7 timesteps

    seq = x_ref[...]                    # (T*Bp, D_in), time-major stacked

    h = None
    for l in range(num_layers):
        wih = layer_refs[3 * l][...]        # (D_in_l, 4H)   gate order [i,f,o,g]
        whh = layer_refs[3 * l + 1][...]    # (H, 4H)
        b = layer_refs[3 * l + 2][...]      # (1, 4H)        b_ih + b_hh, fused order

        # Hoisted input projection for ALL timesteps: one lane-dense MXU op per layer.
        zx = jnp.dot(seq, wih, preferred_element_type=jnp.float32) + b   # (T*Bp, 4H)

        h = jnp.zeros((Bp, H), jnp.float32)
        c = jnp.zeros((Bp, H), jnp.float32)
        outs = []
        for t in range(T):                  # static unroll, T = 7
            z = zx[t * Bp:(t + 1) * Bp, :] + jnp.dot(
                h, whh, preferred_element_type=jnp.float32)      # (Bp, 4H)
            s = jax.nn.sigmoid(z[:, :3 * H])   # one wide sigmoid over i|f|o lanes
            g = jnp.tanh(z[:, 3 * H:])         # tanh over the trailing g lanes
            i_g = s[:, :H]
            f_g = s[:, H:2 * H]
            o_g = s[:, 2 * H:]
            c = f_g * c + i_g * g
            h = o_g * jnp.tanh(c)
            outs.append(h)

        if l < num_layers - 1:
            # Hidden sequence of this layer becomes the stacked input of the next.
            seq = jnp.concatenate(outs, axis=0)   # (T*Bp, H)

    # fc2 over concat([out[:, -1, :], x[:, 11:, 0]]) done as two matmuls + bias
    # (avoids a lane concat; semantics identical to the PyTorch cat + Linear).
    out = (jnp.dot(h, wfc2h_ref[...], preferred_element_type=jnp.float32)
           + jnp.dot(xtail_ref[...], wfc2x_ref[...], preferred_element_type=jnp.float32)
           + bfc2_ref[...])
    o_ref[...] = out


def lstm_model_forward(x, params):
    B, T_total, D_in = x.shape
    T = 7
    B_pad = ((B + 7) // 8) * 8          # pad batch to a sublane multiple

    # LSTM input: time-major, batch-padded, stacked as a (T*B_pad, D_in) slab so the
    # kernel never slices the middle axis and the fused W_ih matmul is one shot.
    x_lstm = x[:, :T, :].astype(jnp.float32)            # (B, T, D_in)
    x_tm = jnp.transpose(x_lstm, (1, 0, 2))             # (T, B, D_in)
    x_tm = jnp.pad(x_tm, ((0, 0), (0, B_pad - B), (0, 0)))
    x_slab = x_tm.reshape(T * B_pad, D_in)

    x_tail = x[:, 11:, 0].astype(jnp.float32)           # (B, T_total-11)
    x_tail = jnp.pad(x_tail, ((0, B_pad - B), (0, 0)))  # (B_pad, T_total-11)

    # Pack per-gate weights into fused 4H-wide matrices, reordering gates from
    # PyTorch's [i, f, g, o] to [i, f, o, g] so sigmoid/tanh each get one
    # contiguous lane slice inside the kernel.
    perm = (0, 1, 3, 2)
    fused = []
    for (w_ih, w_hh, b) in params["lstm_layers"]:
        wih_f = jnp.concatenate([w_ih[g] for g in perm], axis=1)   # (D_in_l, 4H)
        whh_f = jnp.concatenate([w_hh[g] for g in perm], axis=1)   # (H, 4H)
        b_f = jnp.concatenate([b[g] for g in perm], axis=1)        # (1, 4H)
        fused += [wih_f, whh_f, b_f]

    inputs = [x_slab, x_tail,
              params["w_fc2_h"], params["w_fc2_x"], params["b_fc2"]] + fused

    # Everything (inputs + weights) is well under 1 MiB -> single gridless call,
    # all operands resident in VMEM.
    out = pl.pallas_call(
        _lstm_fc2_kernel,
        out_shape=jax.ShapeDtypeStruct((B_pad, 1), jnp.float32),
        in_specs=[pl.BlockSpec(memory_space=pltpu.MemorySpace.VMEM)] * len(inputs),
        out_specs=pl.BlockSpec(memory_space=pltpu.MemorySpace.VMEM),
    )(*inputs)
    return out[:B]


def init_params(key, input_dim, hidden_dim, layer_dim, output_dim):
    # Deterministic synthetic init, PyTorch-style U(-1/sqrt(H), 1/sqrt(H)).
    # Kept in the raw per-gate [i, f, g, o] layout; the wrapper fuses/reorders.
    k = 1.0 / float(hidden_dim) ** 0.5
    layers = []
    for l in range(layer_dim):
        d_in = input_dim if l == 0 else hidden_dim
        key, k1, k2, k3, k4 = jax.random.split(key, 5)
        w_ih = jax.random.uniform(k1, (4, d_in, hidden_dim), jnp.float32, -k, k)
        w_hh = jax.random.uniform(k2, (4, hidden_dim, hidden_dim), jnp.float32, -k, k)
        b_ih = jax.random.uniform(k3, (4, 1, hidden_dim), jnp.float32, -k, k)
        b_hh = jax.random.uniform(k4, (4, 1, hidden_dim), jnp.float32, -k, k)
        layers.append((w_ih, w_hh, b_ih + b_hh))

    kk = 1.0 / float(output_dim + 2) ** 0.5
    key, k5, k6 = jax.random.split(key, 3)
    w_fc2 = jax.random.uniform(k5, (output_dim + 2, 1), jnp.float32, -kk, kk)
    b_fc2 = jax.random.uniform(k6, (1, 1), jnp.float32, -kk, kk)

    return {
        "lstm_layers": layers,
        "w_fc2_h": w_fc2[:hidden_dim, :],   # acts on out[:, -1, :]
        "w_fc2_x": w_fc2[hidden_dim:, :],   # acts on x[:, 11:, 0]
        "b_fc2": b_fc2,
    }


def reference_forward(x, params):
    # Pure-JAX reference with PyTorch LSTM semantics (raw per-gate weights,
    # unpadded batch) to validate the fused/reordered/padded kernel.
    x_lstm = x[:, 0:7, :].astype(jnp.float32)
    x_tail = x[:, 11:, 0].astype(jnp.float32)
    B, T, _ = x_lstm.shape
    H = params["w_fc2_h"].shape[0]
    seq = [x_lstm[:, t, :] for t in range(T)]
    for (w_ih, w_hh, b) in params["lstm_layers"]:
        h = jnp.zeros((B, H), jnp.float32)
        c = jnp.zeros((B, H), jnp.float32)
        outs = []
        for t in range(T):
            z = [seq[t] @ w_ih[g] + h @ w_hh[g] + b[g] for g in range(4)]
            i_g, f_g = jax.nn.sigmoid(z[0]), jax.nn.sigmoid(z[1])
            g_g, o_g = jnp.tanh(z[2]), jax.nn.sigmoid(z[3])
            c = f_g * c + i_g * g_g
            h = o_g * jnp.tanh(c)
            outs.append(h)
        seq = outs
    return seq[-1] @ params["w_fc2_h"] + x_tail @ params["w_fc2_x"] + params["b_fc2"]


if __name__ == "__main__":
    # Small shapes consistent with the forward pass:
    # hidden_dim + (seq - 11) must equal output_dim + 2  ->  hidden=output=32, seq=13.
    batch, seq_len, input_dim = 2, 13, 8
    hidden_dim, layer_dim, output_dim = 32, 2, 32

    key = jax.random.PRNGKey(0)
    key, pkey, xkey = jax.random.split(key, 3)
    params = init_params(pkey, input_dim, hidden_dim, layer_dim, output_dim)
    x = jax.random.normal(xkey, (batch, seq_len, input_dim), jnp.float32)

    out = lstm_model_forward(x, params)
    out = jax.block_until_ready(out)

    ref = reference_forward(x, params)
    assert out.shape == (batch, 1), out.shape
    assert jnp.allclose(out, ref, atol=1e-4, rtol=1e-4), (out, ref)
    print("KERNEL_OK")
</pallas_src>

<mosaic_0001>
module attributes {stable_mosaic.version = 11 : i64} {
  func.func @_lstm_fc2_kernel(%arg0: memref<56x8xf32, #tpu.memory_space<vmem>>, %arg1: memref<8x2xf32, #tpu.memory_space<vmem>>, %arg2: memref<32x1xf32, #tpu.memory_space<vmem>>, %arg3: memref<2x1xf32, #tpu.memory_space<vmem>>, %arg4: memref<1x1xf32, #tpu.memory_space<vmem>>, %arg5: memref<8x128xf32, #tpu.memory_space<vmem>>, %arg6: memref<32x128xf32, #tpu.memory_space<vmem>>, %arg7: memref<1x128xf32, #tpu.memory_space<vmem>>, %arg8: memref<32x128xf32, #tpu.memory_space<vmem>>, %arg9: memref<32x128xf32, #tpu.memory_space<vmem>>, %arg10: memref<1x128xf32, #tpu.memory_space<vmem>>, %arg11: memref<8x1xf32, #tpu.memory_space<vmem>>) attributes {dimension_semantics = [], scalar_prefetch = 0 : i64, scratch_operands = 0 : i64, tpu.core_type = #tpu.core_type<tc>} {
    %c0 = arith.constant 0 : index
    %c0_0 = arith.constant 0 : index
    %0 = vector.load %arg0[%c0, %c0_0] : memref<56x8xf32, #tpu.memory_space<vmem>>, vector<56x8xf32>
    %c0_1 = arith.constant 0 : index
    %c0_2 = arith.constant 0 : index
    %1 = vector.load %arg5[%c0_1, %c0_2] : memref<8x128xf32, #tpu.memory_space<vmem>>, vector<8x128xf32>
    %c0_3 = arith.constant 0 : index
    %c0_4 = arith.constant 0 : index
    %2 = vector.load %arg6[%c0_3, %c0_4] : memref<32x128xf32, #tpu.memory_space<vmem>>, vector<32x128xf32>
    %c0_5 = arith.constant 0 : index
    %c0_6 = arith.constant 0 : index
    %3 = vector.load %arg7[%c0_5, %c0_6] : memref<1x128xf32, #tpu.memory_space<vmem>>, vector<1x128xf32>
    %cst = arith.constant dense<0.000000e+00> : vector<56x128xf32>
    %4 = tpu.matmul %0, %1, %cst {dimension_numbers = #tpu.dot_dimension_numbers<[1], [0], [0], [1], [0, 0, 1, 1], [], []>} : vector<56x8xf32>, vector<8x128xf32>, vector<56x128xf32> -> vector<56x128xf32>
    %5 = vector.broadcast %3 : vector<1x128xf32> to vector<56x128xf32>
    %6 = arith.addf %4, %5 : vector<56x128xf32>
    %cst_7 = arith.constant 0.000000e+00 : f32
    %7 = vector.broadcast %cst_7 : f32 to vector<8x32xf32>
    %cst_8 = arith.constant 0.000000e+00 : f32
    %8 = vector.broadcast %cst_8 : f32 to vector<8x32xf32>
    %9 = vector.extract_strided_slice %6 {offsets = [0, 0], sizes = [8, 128], strides = [1, 1]} : vector<56x128xf32> to vector<8x128xf32>
    %cst_9 = arith.constant dense<0.000000e+00> : vector<8x128xf32>
    %10 = tpu.matmul %7, %2, %cst_9 {dimension_numbers = #tpu.dot_dimension_numbers<[1], [0], [0], [1], [0, 0, 1, 1], [], []>} : vector<8x32xf32>, vector<32x128xf32>, vector<8x128xf32> -> vector<8x128xf32>
    %11 = arith.addf %9, %10 : vector<8x128xf32>
    %12 = vector.extract_strided_slice %11 {offsets = [0, 0], sizes = [8, 96], strides = [1, 1]} : vector<8x128xf32> to vector<8x96xf32>
    %13 = arith.negf %12 : vector<8x96xf32>
    %14 = math.exp %13 : vector<8x96xf32>
    %cst_10 = arith.constant 1.000000e+00 : f32
    %15 = vector.broadcast %cst_10 : f32 to vector<8x96xf32>
    %16 = arith.addf %15, %14 : vector<8x96xf32>
    %17 = arith.divf %15, %16 : vector<8x96xf32>
    %18 = vector.extract_strided_slice %11 {offsets = [0, 96], sizes = [8, 32], strides = [1, 1]} : vector<8x128xf32> to vector<8x32xf32>
    %19 = math.tanh %18 : vector<8x32xf32>
    %20 = vector.extract_strided_slice %17 {offsets = [0, 0], sizes = [8, 32], strides = [1, 1]} : vector<8x96xf32> to vector<8x32xf32>
    %21 = vector.extract_strided_slice %17 {offsets = [0, 32], sizes = [8, 32], strides = [1, 1]} : vector<8x96xf32> to vector<8x32xf32>
    %22 = vector.extract_strided_slice %17 {offsets = [0, 64], sizes = [8, 32], strides = [1, 1]} : vector<8x96xf32> to vector<8x32xf32>
    %23 = arith.mulf %21, %8 : vector<8x32xf32>
    %24 = arith.mulf %20, %19 : vector<8x32xf32>
    %25 = arith.addf %23, %24 : vector<8x32xf32>
    %26 = math.tanh %25 : vector<8x32xf32>
    %27 = arith.mulf %22, %26 : vector<8x32xf32>
    %28 = vector.extract_strided_slice %6 {offsets = [8, 0], sizes = [8, 128], strides = [1, 1]} : vector<56x128xf32> to vector<8x128xf32>
    %cst_11 = arith.constant dense<0.000000e+00> : vector<8x128xf32>
    %29 = tpu.matmul %27, %2, %cst_11 {dimension_numbers = #tpu.dot_dimension_numbers<[1], [0], [0], [1], [0, 0, 1, 1], [], []>} : vector<8x32xf32>, vector<32x128xf32>, vector<8x128xf32> -> vector<8x128xf32>
    %30 = arith.addf %28, %29 : vector<8x128xf32>
    %31 = vector.extract_strided_slice %30 {offsets = [0, 0], sizes = [8, 96], strides = [1, 1]} : vector<8x128xf32> to vector<8x96xf32>
    %32 = arith.negf %31 : vector<8x96xf32>
    %33 = math.exp %32 : vector<8x96xf32>
    %cst_12 = arith.constant 1.000000e+00 : f32
    %34 = vector.broadcast %cst_12 : f32 to vector<8x96xf32>
    %35 = arith.addf %34, %33 : vector<8x96xf32>
    %36 = arith.divf %34, %35 : vector<8x96xf32>
    %37 = vector.extract_strided_slice %30 {offsets = [0, 96], sizes = [8, 32], strides = [1, 1]} : vector<8x128xf32> to vector<8x32xf32>
    %38 = math.tanh %37 : vector<8x32xf32>
    %39 = vector.extract_strided_slice %36 {offsets = [0, 0], sizes = [8, 32], strides = [1, 1]} : vector<8x96xf32> to vector<8x32xf32>
    %40 = vector.extract_strided_slice %36 {offsets = [0, 32], sizes = [8, 32], strides = [1, 1]} : vector<8x96xf32> to vector<8x32xf32>
    %41 = vector.extract_strided_slice %36 {offsets = [0, 64], sizes = [8, 32], strides = [1, 1]} : vector<8x96xf32> to vector<8x32xf32>
    %42 = arith.mulf %40, %25 : vector<8x32xf32>
    %43 = arith.mulf %39, %38 : vector<8x32xf32>
    %44 = arith.addf %42, %43 : vector<8x32xf32>
    %45 = math.tanh %44 : vector<8x32xf32>
    %46 = arith.mulf %41, %45 : vector<8x32xf32>
    %47 = vector.extract_strided_slice %6 {offsets = [16, 0], sizes = [8, 128], strides = [1, 1]} : vector<56x128xf32> to vector<8x128xf32>
    %cst_13 = arith.constant dense<0.000000e+00> : vector<8x128xf32>
    %48 = tpu.matmul %46, %2, %cst_13 {dimension_numbers = #tpu.dot_dimension_numbers<[1], [0], [0], [1], [0, 0, 1, 1], [], []>} : vector<8x32xf32>, vector<32x128xf32>, vector<8x128xf32> -> vector<8x128xf32>
    %49 = arith.addf %47, %48 : vector<8x128xf32>
    %50 = vector.extract_strided_slice %49 {offsets = [0, 0], sizes = [8, 96], strides = [1, 1]} : vector<8x128xf32> to vector<8x96xf32>
    %51 = arith.negf %50 : vector<8x96xf32>
    %52 = math.exp %51 : vector<8x96xf32>
    %cst_14 = arith.constant 1.000000e+00 : f32
    %53 = vector.broadcast %cst_14 : f32 to vector<8x96xf32>
    %54 = arith.addf %53, %52 : vector<8x96xf32>
    %55 = arith.divf %53, %54 : vector<8x96xf32>
    %56 = vector.extract_strided_slice %49 {offsets = [0, 96], sizes = [8, 32], strides = [1, 1]} : vector<8x128xf32> to vector<8x32xf32>
    %57 = math.tanh %56 : vector<8x32xf32>
    %58 = vector.extract_strided_slice %55 {offsets = [0, 0], sizes = [8, 32], strides = [1, 1]} : vector<8x96xf32> to vector<8x32xf32>
    %59 = vector.extract_strided_slice %55 {offsets = [0, 32], sizes = [8, 32], strides = [1, 1]} : vector<8x96xf32> to vector<8x32xf32>
    %60 = vector.extract_strided_slice %55 {offsets = [0, 64], sizes = [8, 32], strides = [1, 1]} : vector<8x96xf32> to vector<8x32xf32>
    %61 = arith.mulf %59, %44 : vector<8x32xf32>
    %62 = arith.mulf %58, %57 : vector<8x32xf32>
    %63 = arith.addf %61, %62 : vector<8x32xf32>
    %64 = math.tanh %63 : vector<8x32xf32>
    %65 = arith.mulf %60, %64 : vector<8x32xf32>
    %66 = vector.extract_strided_slice %6 {offsets = [24, 0], sizes = [8, 128], strides = [1, 1]} : vector<56x128xf32> to vector<8x128xf32>
    %cst_15 = arith.constant dense<0.000000e+00> : vector<8x128xf32>
    %67 = tpu.matmul %65, %2, %cst_15 {dimension_numbers = #tpu.dot_dimension_numbers<[1], [0], [0], [1], [0, 0, 1, 1], [], []>} : vector<8x32xf32>, vector<32x128xf32>, vector<8x128xf32> -> vector<8x128xf32>
    %68 = arith.addf %66, %67 : vector<8x128xf32>
    %69 = vector.extract_strided_slice %68 {offsets = [0, 0], sizes = [8, 96], strides = [1, 1]} : vector<8x128xf32> to vector<8x96xf32>
    %70 = arith.negf %69 : vector<8x96xf32>
    %71 = math.exp %70 : vector<8x96xf32>
    %cst_16 = arith.constant 1.000000e+00 : f32
    %72 = vector.broadcast %cst_16 : f32 to vector<8x96xf32>
    %73 = arith.addf %72, %71 : vector<8x96xf32>
    %74 = arith.divf %72, %73 : vector<8x96xf32>
    %75 = vector.extract_strided_slice %68 {offsets = [0, 96], sizes = [8, 32], strides = [1, 1]} : vector<8x128xf32> to vector<8x32xf32>
    %76 = math.tanh %75 : vector<8x32xf32>
    %77 = vector.extract_strided_slice %74 {offsets = [0, 0], sizes = [8, 32], strides = [1, 1]} : vector<8x96xf32> to vector<8x32xf32>
    %78 = vector.extract_strided_slice %74 {offsets = [0, 32], sizes = [8, 32], strides = [1, 1]} : vector<8x96xf32> to vector<8x32xf32>
    %79 = vector.extract_strided_slice %74 {offsets = [0, 64], sizes = [8, 32], strides = [1, 1]} : vector<8x96xf32> to vector<8x32xf32>
    %80 = arith.mulf %78, %63 : vector<8x32xf32>
    %81 = arith.mulf %77, %76 : vector<8x32xf32>
    %82 = arith.addf %80, %81 : vector<8x32xf32>
    %83 = math.tanh %82 : vector<8x32xf32>
    %84 = arith.mulf %79, %83 : vector<8x32xf32>
    %85 = vector.extract_strided_slice %6 {offsets = [32, 0], sizes = [8, 128], strides = [1, 1]} : vector<56x128xf32> to vector<8x128xf32>
    %cst_17 = arith.constant dense<0.000000e+00> : vector<8x128xf32>
    %86 = tpu.matmul %84, %2, %cst_17 {dimension_numbers = #tpu.dot_dimension_numbers<[1], [0], [0], [1], [0, 0, 1, 1], [], []>} : vector<8x32xf32>, vector<32x128xf32>, vector<8x128xf32> -> vector<8x128xf32>
    %87 = arith.addf %85, %86 : vector<8x128xf32>
    %88 = vector.extract_strided_slice %87 {offsets = [0, 0], sizes = [8, 96], strides = [1, 1]} : vector<8x128xf32> to vector<8x96xf32>
    %89 = arith.negf %88 : vector<8x96xf32>
    %90 = math.exp %89 : vector<8x96xf32>
    %cst_18 = arith.constant 1.000000e+00 : f32
    %91 = vector.broadcast %cst_18 : f32 to vector<8x96xf32>
    %92 = arith.addf %91, %90 : vector<8x96xf32>
    %93 = arith.divf %91, %92 : vector<8x96xf32>
    %94 = vector.extract_strided_slice %87 {offsets = [0, 96], sizes = [8, 32], strides = [1, 1]} : vector<8x128xf32> to vector<8x32xf32>
    %95 = math.tanh %94 : vector<8x32xf32>
    %96 = vector.extract_strided_slice %93 {offsets = [0, 0], sizes = [8, 32], strides = [1, 1]} : vector<8x96xf32> to vector<8x32xf32>
    %97 = vector.extract_strided_slice %93 {offsets = [0, 32], sizes = [8, 32], strides = [1, 1]} : vector<8x96xf32> to vector<8x32xf32>
    %98 = vector.extract_strided_slice %93 {offsets = [0, 64], sizes = [8, 32], strides = [1, 1]} : vector<8x96xf32> to vector<8x32xf32>
    %99 = arith.mulf %97, %82 : vector<8x32xf32>
    %100 = arith.mulf %96, %95 : vector<8x32xf32>
    %101 = arith.addf %99, %100 : vector<8x32xf32>
    %102 = math.tanh %101 : vector<8x32xf32>
    %103 = arith.mulf %98, %102 : vector<8x32xf32>
    %104 = vector.extract_strided_slice %6 {offsets = [40, 0], sizes = [8, 128], strides = [1, 1]} : vector<56x128xf32> to vector<8x128xf32>
    %cst_19 = arith.constant dense<0.000000e+00> : vector<8x128xf32>
    %105 = tpu.matmul %103, %2, %cst_19 {dimension_numbers = #tpu.dot_dimension_numbers<[1], [0], [0], [1], [0, 0, 1, 1], [], []>} : vector<8x32xf32>, vector<32x128xf32>, vector<8x128xf32> -> vector<8x128xf32>
    %106 = arith.addf %104, %105 : vector<8x128xf32>
    %107 = vector.extract_strided_slice %106 {offsets = [0, 0], sizes = [8, 96], strides = [1, 1]} : vector<8x128xf32> to vector<8x96xf32>
    %108 = arith.negf %107 : vector<8x96xf32>
    %109 = math.exp %108 : vector<8x96xf32>
    %cst_20 = arith.constant 1.000000e+00 : f32
    %110 = vector.broadcast %cst_20 : f32 to vector<8x96xf32>
    %111 = arith.addf %110, %109 : vector<8x96xf32>
    %112 = arith.divf %110, %111 : vector<8x96xf32>
    %113 = vector.extract_strided_slice %106 {offsets = [0, 96], sizes = [8, 32], strides = [1, 1]} : vector<8x128xf32> to vector<8x32xf32>
    %114 = math.tanh %113 : vector<8x32xf32>
    %115 = vector.extract_strided_slice %112 {offsets = [0, 0], sizes = [8, 32], strides = [1, 1]} : vector<8x96xf32> to vector<8x32xf32>
    %116 = vector.extract_strided_slice %112 {offsets = [0, 32], sizes = [8, 32], strides = [1, 1]} : vector<8x96xf32> to vector<8x32xf32>
    %117 = vector.extract_strided_slice %112 {offsets = [0, 64], sizes = [8, 32], strides = [1, 1]} : vector<8x96xf32> to vector<8x32xf32>
    %118 = arith.mulf %116, %101 : vector<8x32xf32>
    %119 = arith.mulf %115, %114 : vector<8x32xf32>
    %120 = arith.addf %118, %119 : vector<8x32xf32>
    %121 = math.tanh %120 : vector<8x32xf32>
    %122 = arith.mulf %117, %121 : vector<8x32xf32>
    %123 = vector.extract_strided_slice %6 {offsets = [48, 0], sizes = [8, 128], strides = [1, 1]} : vector<56x128xf32> to vector<8x128xf32>
    %cst_21 = arith.constant dense<0.000000e+00> : vector<8x128xf32>
    %124 = tpu.matmul %122, %2, %cst_21 {dimension_numbers = #tpu.dot_dimension_numbers<[1], [0], [0], [1], [0, 0, 1, 1], [], []>} : vector<8x32xf32>, vector<32x128xf32>, vector<8x128xf32> -> vector<8x128xf32>
    %125 = arith.addf %123, %124 : vector<8x128xf32>
    %126 = vector.extract_strided_slice %125 {offsets = [0, 0], sizes = [8, 96], strides = [1, 1]} : vector<8x128xf32> to vector<8x96xf32>
    %127 = arith.negf %126 : vector<8x96xf32>
    %128 = math.exp %127 : vector<8x96xf32>
    %cst_22 = arith.constant 1.000000e+00 : f32
    %129 = vector.broadcast %cst_22 : f32 to vector<8x96xf32>
    %130 = arith.addf %129, %128 : vector<8x96xf32>
    %131 = arith.divf %129, %130 : vector<8x96xf32>
    %132 = vector.extract_strided_slice %125 {offsets = [0, 96], sizes = [8, 32], strides = [1, 1]} : vector<8x128xf32> to vector<8x32xf32>
    %133 = math.tanh %132 : vector<8x32xf32>
    %134 = vector.extract_strided_slice %131 {offsets = [0, 0], sizes = [8, 32], strides = [1, 1]} : vector<8x96xf32> to vector<8x32xf32>
    %135 = vector.extract_strided_slice %131 {offsets = [0, 32], sizes = [8, 32], strides = [1, 1]} : vector<8x96xf32> to vector<8x32xf32>
    %136 = vector.extract_strided_slice %131 {offsets = [0, 64], sizes = [8, 32], strides = [1, 1]} : vector<8x96xf32> to vector<8x32xf32>
    %137 = arith.mulf %135, %120 : vector<8x32xf32>
    %138 = arith.mulf %134, %133 : vector<8x32xf32>
    %139 = arith.addf %137, %138 : vector<8x32xf32>
    %140 = math.tanh %139 : vector<8x32xf32>
    %141 = arith.mulf %136, %140 : vector<8x32xf32>
    %142 = tpu.concatenate %27, %46, %65, %84, %103, %122, %141 in 0 : vector<8x32xf32>, vector<8x32xf32>, vector<8x32xf32>, vector<8x32xf32>, vector<8x32xf32>, vector<8x32xf32>, vector<8x32xf32> -> vector<56x32xf32>
    %c0_23 = arith.constant 0 : index
    %c0_24 = arith.constant 0 : index
    %143 = vector.load %arg8[%c0_23, %c0_24] : memref<32x128xf32, #tpu.memory_space<vmem>>, vector<32x128xf32>
    %c0_25 = arith.constant 0 : index
    %c0_26 = arith.constant 0 : index
    %144 = vector.load %arg9[%c0_25, %c0_26] : memref<32x128xf32, #tpu.memory_space<vmem>>, vector<32x128xf32>
    %c0_27 = arith.constant 0 : index
    %c0_28 = arith.constant 0 : index
    %145 = vector.load %arg10[%c0_27, %c0_28] : memref<1x128xf32, #tpu.memory_space<vmem>>, vector<1x128xf32>
    %cst_29 = arith.constant dense<0.000000e+00> : vector<56x128xf32>
    %146 = tpu.matmul %142, %143, %cst_29 {dimension_numbers = #tpu.dot_dimension_numbers<[1], [0], [0], [1], [0, 0, 1, 1], [], []>} : vector<56x32xf32>, vector<32x128xf32>, vector<56x128xf32> -> vector<56x128xf32>
    %147 = vector.broadcast %145 : vector<1x128xf32> to vector<56x128xf32>
    %148 = arith.addf %146, %147 : vector<56x128xf32>
    %cst_30 = arith.constant 0.000000e+00 : f32
    %149 = vector.broadcast %cst_30 : f32 to vector<8x32xf32>
    %cst_31 = arith.constant 0.000000e+00 : f32
    %150 = vector.broadcast %cst_31 : f32 to vector<8x32xf32>
    %151 = vector.extract_strided_slice %148 {offsets = [0, 0], sizes = [8, 128], strides = [1, 1]} : vector<56x128xf32> to vector<8x128xf32>
    %cst_32 = arith.constant dense<0.000000e+00> : vector<8x128xf32>
    %152 = tpu.matmul %149, %144, %cst_32 {dimension_numbers = #tpu.dot_dimension_numbers<[1], [0], [0], [1], [0, 0, 1, 1], [], []>} : vector<8x32xf32>, vector<32x128xf32>, vector<8x128xf32> -> vector<8x128xf32>
    %153 = arith.addf %151, %152 : vector<8x128xf32>
    %154 = vector.extract_strided_slice %153 {offsets = [0, 0], sizes = [8, 96], strides = [1, 1]} : vector<8x128xf32> to vector<8x96xf32>
    %155 = arith.negf %154 : vector<8x96xf32>
    %156 = math.exp %155 : vector<8x96xf32>
    %cst_33 = arith.constant 1.000000e+00 : f32
    %157 = vector.broadcast %cst_33 : f32 to vector<8x96xf32>
    %158 = arith.addf %157, %156 : vector<8x96xf32>
    %159 = arith.divf %157, %158 : vector<8x96xf32>
    %160 = vector.extract_strided_slice %153 {offsets = [0, 96], sizes = [8, 32], strides = [1, 1]} : vector<8x128xf32> to vector<8x32xf32>
    %161 = math.tanh %160 : vector<8x32xf32>
    %162 = vector.extract_strided_slice %159 {offsets = [0, 0], sizes = [8, 32], strides = [1, 1]} : vector<8x96xf32> to vector<8x32xf32>
    %163 = vector.extract_strided_slice %159 {offsets = [0, 32], sizes = [8, 32], strides = [1, 1]} : vector<8x96xf32> to vector<8x32xf32>
    %164 = vector.extract_strided_slice %159 {offsets = [0, 64], sizes = [8, 32], strides = [1, 1]} : vector<8x96xf32> to vector<8x32xf32>
    %165 = arith.mulf %163, %150 : vector<8x32xf32>
    %166 = arith.mulf %162, %161 : vector<8x32xf32>
    %167 = arith.addf %165, %166 : vector<8x32xf32>
    %168 = math.tanh %167 : vector<8x32xf32>
    %169 = arith.mulf %164, %168 : vector<8x32xf32>
    %170 = vector.extract_strided_slice %148 {offsets = [8, 0], sizes = [8, 128], strides = [1, 1]} : vector<56x128xf32> to vector<8x128xf32>
    %cst_34 = arith.constant dense<0.000000e+00> : vector<8x128xf32>
    %171 = tpu.matmul %169, %144, %cst_34 {dimension_numbers = #tpu.dot_dimension_numbers<[1], [0], [0], [1], [0, 0, 1, 1], [], []>} : vector<8x32xf32>, vector<32x128xf32>, vector<8x128xf32> -> vector<8x128xf32>
    %172 = arith.addf %170, %171 : vector<8x128xf32>
    %173 = vector.extract_strided_slice %172 {offsets = [0, 0], sizes = [8, 96], strides = [1, 1]} : vector<8x128xf32> to vector<8x96xf32>
    %174 = arith.negf %173 : vector<8x96xf32>
    %175 = math.exp %174 : vector<8x96xf32>
    %cst_35 = arith.constant 1.000000e+00 : f32
    %176 = vector.broadcast %cst_35 : f32 to vector<8x96xf32>
    %177 = arith.addf %176, %175 : vector<8x96xf32>
    %178 = arith.divf %176, %177 : vector<8x96xf32>
    %179 = vector.extract_strided_slice %172 {offsets = [0, 96], sizes = [8, 32], strides = [1, 1]} : vector<8x128xf32> to vector<8x32xf32>
    %180 = math.tanh %179 : vector<8x32xf32>
    %181 = vector.extract_strided_slice %178 {offsets = [0, 0], sizes = [8, 32], strides = [1, 1]} : vector<8x96xf32> to vector<8x32xf32>
    %182 = vector.extract_strided_slice %178 {offsets = [0, 32], sizes = [8, 32], strides = [1, 1]} : vector<8x96xf32> to vector<8x32xf32>
    %183 = vector.extract_strided_slice %178 {offsets = [0, 64], sizes = [8, 32], strides = [1, 1]} : vector<8x96xf32> to vector<8x32xf32>
    %184 = arith.mulf %182, %167 : vector<8x32xf32>
    %185 = arith.mulf %181, %180 : vector<8x32xf32>
    %186 = arith.addf %184, %185 : vector<8x32xf32>
    %187 = math.tanh %186 : vector<8x32xf32>
    %188 = arith.mulf %183, %187 : vector<8x32xf32>
    %189 = vector.extract_strided_slice %148 {offsets = [16, 0], sizes = [8, 128], strides = [1, 1]} : vector<56x128xf32> to vector<8x128xf32>
    %cst_36 = arith.constant dense<0.000000e+00> : vector<8x128xf32>
    %190 = tpu.matmul %188, %144, %cst_36 {dimension_numbers = #tpu.dot_dimension_numbers<[1], [0], [0], [1], [0, 0, 1, 1], [], []>} : vector<8x32xf32>, vector<32x128xf32>, vector<8x128xf32> -> vector<8x128xf32>
    %191 = arith.addf %189, %190 : vector<8x128xf32>
    %192 = vector.extract_strided_slice %191 {offsets = [0, 0], sizes = [8, 96], strides = [1, 1]} : vector<8x128xf32> to vector<8x96xf32>
    %193 = arith.negf %192 : vector<8x96xf32>
    %194 = math.exp %193 : vector<8x96xf32>
    %cst_37 = arith.constant 1.000000e+00 : f32
    %195 = vector.broadcast %cst_37 : f32 to vector<8x96xf32>
    %196 = arith.addf %195, %194 : vector<8x96xf32>
    %197 = arith.divf %195, %196 : vector<8x96xf32>
    %198 = vector.extract_strided_slice %191 {offsets = [0, 96], sizes = [8, 32], strides = [1, 1]} : vector<8x128xf32> to vector<8x32xf32>
    %199 = math.tanh %198 : vector<8x32xf32>
    %200 = vector.extract_strided_slice %197 {offsets = [0, 0], sizes = [8, 32], strides = [1, 1]} : vector<8x96xf32> to vector<8x32xf32>
    %201 = vector.extract_strided_slice %197 {offsets = [0, 32], sizes = [8, 32], strides = [1, 1]} : vector<8x96xf32> to vector<8x32xf32>
    %202 = vector.extract_strided_slice %197 {offsets = [0, 64], sizes = [8, 32], strides = [1, 1]} : vector<8x96xf32> to vector<8x32xf32>
    %203 = arith.mulf %201, %186 : vector<8x32xf32>
    %204 = arith.mulf %200, %199 : vector<8x32xf32>
    %205 = arith.addf %203, %204 : vector<8x32xf32>
    %206 = math.tanh %205 : vector<8x32xf32>
    %207 = arith.mulf %202, %206 : vector<8x32xf32>
    %208 = vector.extract_strided_slice %148 {offsets = [24, 0], sizes = [8, 128], strides = [1, 1]} : vector<56x128xf32> to vector<8x128xf32>
    %cst_38 = arith.constant dense<0.000000e+00> : vector<8x128xf32>
    %209 = tpu.matmul %207, %144, %cst_38 {dimension_numbers = #tpu.dot_dimension_numbers<[1], [0], [0], [1], [0, 0, 1, 1], [], []>} : vector<8x32xf32>, vector<32x128xf32>, vector<8x128xf32> -> vector<8x128xf32>
    %210 = arith.addf %208, %209 : vector<8x128xf32>
    %211 = vector.extract_strided_slice %210 {offsets = [0, 0], sizes = [8, 96], strides = [1, 1]} : vector<8x128xf32> to vector<8x96xf32>
    %212 = arith.negf %211 : vector<8x96xf32>
    %213 = math.exp %212 : vector<8x96xf32>
    %cst_39 = arith.constant 1.000000e+00 : f32
    %214 = vector.broadcast %cst_39 : f32 to vector<8x96xf32>
    %215 = arith.addf %214, %213 : vector<8x96xf32>
    %216 = arith.divf %214, %215 : vector<8x96xf32>
    %217 = vector.extract_strided_slice %210 {offsets = [0, 96], sizes = [8, 32], strides = [1, 1]} : vector<8x128xf32> to vector<8x32xf32>
    %218 = math.tanh %217 : vector<8x32xf32>
    %219 = vector.extract_strided_slice %216 {offsets = [0, 0], sizes = [8, 32], strides = [1, 1]} : vector<8x96xf32> to vector<8x32xf32>
    %220 = vector.extract_strided_slice %216 {offsets = [0, 32], sizes = [8, 32], strides = [1, 1]} : vector<8x96xf32> to vector<8x32xf32>
    %221 = vector.extract_strided_slice %216 {offsets = [0, 64], sizes = [8, 32], strides = [1, 1]} : vector<8x96xf32> to vector<8x32xf32>
    %222 = arith.mulf %220, %205 : vector<8x32xf32>
    %223 = arith.mulf %219, %218 : vector<8x32xf32>
    %224 = arith.addf %222, %223 : vector<8x32xf32>
    %225 = math.tanh %224 : vector<8x32xf32>
    %226 = arith.mulf %221, %225 : vector<8x32xf32>
    %227 = vector.extract_strided_slice %148 {offsets = [32, 0], sizes = [8, 128], strides = [1, 1]} : vector<56x128xf32> to vector<8x128xf32>
    %cst_40 = arith.constant dense<0.000000e+00> : vector<8x128xf32>
    %228 = tpu.matmul %226, %144, %cst_40 {dimension_numbers = #tpu.dot_dimension_numbers<[1], [0], [0], [1], [0, 0, 1, 1], [], []>} : vector<8x32xf32>, vector<32x128xf32>, vector<8x128xf32> -> vector<8x128xf32>
    %229 = arith.addf %227, %228 : vector<8x128xf32>
    %230 = vector.extract_strided_slice %229 {offsets = [0, 0], sizes = [8, 96], strides = [1, 1]} : vector<8x128xf32> to vector<8x96xf32>
    %231 = arith.negf %230 : vector<8x96xf32>
    %232 = math.exp %231 : vector<8x96xf32>
    %cst_41 = arith.constant 1.000000e+00 : f32
    %233 = vector.broadcast %cst_41 : f32 to vector<8x96xf32>
    %234 = arith.addf %233, %232 : vector<8x96xf32>
    %235 = arith.divf %233, %234 : vector<8x96xf32>
    %236 = vector.extract_strided_slice %229 {offsets = [0, 96], sizes = [8, 32], strides = [1, 1]} : vector<8x128xf32> to vector<8x32xf32>
    %237 = math.tanh %236 : vector<8x32xf32>
    %238 = vector.extract_strided_slice %235 {offsets = [0, 0], sizes = [8, 32], strides = [1, 1]} : vector<8x96xf32> to vector<8x32xf32>
    %239 = vector.extract_strided_slice %235 {offsets = [0, 32], sizes = [8, 32], strides = [1, 1]} : vector<8x96xf32> to vector<8x32xf32>
    %240 = vector.extract_strided_slice %235 {offsets = [0, 64], sizes = [8, 32], strides = [1, 1]} : vector<8x96xf32> to vector<8x32xf32>
    %241 = arith.mulf %239, %224 : vector<8x32xf32>
    %242 = arith.mulf %238, %237 : vector<8x32xf32>
    %243 = arith.addf %241, %242 : vector<8x32xf32>
    %244 = math.tanh %243 : vector<8x32xf32>
    %245 = arith.mulf %240, %244 : vector<8x32xf32>
    %246 = vector.extract_strided_slice %148 {offsets = [40, 0], sizes = [8, 128], strides = [1, 1]} : vector<56x128xf32> to vector<8x128xf32>
    %cst_42 = arith.constant dense<0.000000e+00> : vector<8x128xf32>
    %247 = tpu.matmul %245, %144, %cst_42 {dimension_numbers = #tpu.dot_dimension_numbers<[1], [0], [0], [1], [0, 0, 1, 1], [], []>} : vector<8x32xf32>, vector<32x128xf32>, vector<8x128xf32> -> vector<8x128xf32>
    %248 = arith.addf %246, %247 : vector<8x128xf32>
    %249 = vector.extract_strided_slice %248 {offsets = [0, 0], sizes = [8, 96], strides = [1, 1]} : vector<8x128xf32> to vector<8x96xf32>
    %250 = arith.negf %249 : vector<8x96xf32>
    %251 = math.exp %250 : vector<8x96xf32>
    %cst_43 = arith.constant 1.000000e+00 : f32
    %252 = vector.broadcast %cst_43 : f32 to vector<8x96xf32>
    %253 = arith.addf %252, %251 : vector<8x96xf32>
    %254 = arith.divf %252, %253 : vector<8x96xf32>
    %255 = vector.extract_strided_slice %248 {offsets = [0, 96], sizes = [8, 32], strides = [1, 1]} : vector<8x128xf32> to vector<8x32xf32>
    %256 = math.tanh %255 : vector<8x32xf32>
    %257 = vector.extract_strided_slice %254 {offsets = [0, 0], sizes = [8, 32], strides = [1, 1]} : vector<8x96xf32> to vector<8x32xf32>
    %258 = vector.extract_strided_slice %254 {offsets = [0, 32], sizes = [8, 32], strides = [1, 1]} : vector<8x96xf32> to vector<8x32xf32>
    %259 = vector.extract_strided_slice %254 {offsets = [0, 64], sizes = [8, 32], strides = [1, 1]} : vector<8x96xf32> to vector<8x32xf32>
    %260 = arith.mulf %258, %243 : vector<8x32xf32>
    %261 = arith.mulf %257, %256 : vector<8x32xf32>
    %262 = arith.addf %260, %261 : vector<8x32xf32>
    %263 = math.tanh %262 : vector<8x32xf32>
    %264 = arith.mulf %259, %263 : vector<8x32xf32>
    %265 = vector.extract_strided_slice %148 {offsets = [48, 0], sizes = [8, 128], strides = [1, 1]} : vector<56x128xf32> to vector<8x128xf32>
    %cst_44 = arith.constant dense<0.000000e+00> : vector<8x128xf32>
    %266 = tpu.matmul %264, %144, %cst_44 {dimension_numbers = #tpu.dot_dimension_numbers<[1], [0], [0], [1], [0, 0, 1, 1], [], []>} : vector<8x32xf32>, vector<32x128xf32>, vector<8x128xf32> -> vector<8x128xf32>
    %267 = arith.addf %265, %266 : vector<8x128xf32>
    %268 = vector.extract_strided_slice %267 {offsets = [0, 0], sizes = [8, 96], strides = [1, 1]} : vector<8x128xf32> to vector<8x96xf32>
    %269 = arith.negf %268 : vector<8x96xf32>
    %270 = math.exp %269 : vector<8x96xf32>
    %cst_45 = arith.constant 1.000000e+00 : f32
    %271 = vector.broadcast %cst_45 : f32 to vector<8x96xf32>
    %272 = arith.addf %271, %270 : vector<8x96xf32>
    %273 = arith.divf %271, %272 : vector<8x96xf32>
    %274 = vector.extract_strided_slice %267 {offsets = [0, 96], sizes = [8, 32], strides = [1, 1]} : vector<8x128xf32> to vector<8x32xf32>
    %275 = math.tanh %274 : vector<8x32xf32>
    %276 = vector.extract_strided_slice %273 {offsets = [0, 0], sizes = [8, 32], strides = [1, 1]} : vector<8x96xf32> to vector<8x32xf32>
    %277 = vector.extract_strided_slice %273 {offsets = [0, 32], sizes = [8, 32], strides = [1, 1]} : vector<8x96xf32> to vector<8x32xf32>
    %278 = vector.extract_strided_slice %273 {offsets = [0, 64], sizes = [8, 32], strides = [1, 1]} : vector<8x96xf32> to vector<8x32xf32>
    %279 = arith.mulf %277, %262 : vector<8x32xf32>
    %280 = arith.mulf %276, %275 : vector<8x32xf32>
    %281 = arith.addf %279, %280 : vector<8x32xf32>
    %282 = math.tanh %281 : vector<8x32xf32>
    %283 = arith.mulf %278, %282 : vector<8x32xf32>
    %c0_46 = arith.constant 0 : index
    %c0_47 = arith.constant 0 : index
    %284 = vector.load %arg2[%c0_46, %c0_47] : memref<32x1xf32, #tpu.memory_space<vmem>>, vector<32x1xf32>
    %cst_48 = arith.constant dense<0.000000e+00> : vector<8x1xf32>
    %285 = tpu.matmul %283, %284, %cst_48 {dimension_numbers = #tpu.dot_dimension_numbers<[1], [0], [0], [1], [0, 0, 1, 1], [], []>} : vector<8x32xf32>, vector<32x1xf32>, vector<8x1xf32> -> vector<8x1xf32>
    %c0_49 = arith.constant 0 : index
    %c0_50 = arith.constant 0 : index
    %286 = vector.load %arg1[%c0_49, %c0_50] : memref<8x2xf32, #tpu.memory_space<vmem>>, vector<8x2xf32>
    %c0_51 = arith.constant 0 : index
    %c0_52 = arith.constant 0 : index
    %287 = vector.load %arg3[%c0_51, %c0_52] : memref<2x1xf32, #tpu.memory_space<vmem>>, vector<2x1xf32>
    %cst_53 = arith.constant dense<0.000000e+00> : vector<8x1xf32>
    %288 = tpu.matmul %286, %287, %cst_53 {dimension_numbers = #tpu.dot_dimension_numbers<[1], [0], [0], [1], [0, 0, 1, 1], [], []>} : vector<8x2xf32>, vector<2x1xf32>, vector<8x1xf32> -> vector<8x1xf32>
    %289 = arith.addf %285, %288 : vector<8x1xf32>
    %c0_54 = arith.constant 0 : index
    %c0_55 = arith.constant 0 : index
    %290 = vector.load %arg4[%c0_54, %c0_55] : memref<1x1xf32, #tpu.memory_space<vmem>>, vector<1x1xf32>
    %291 = vector.broadcast %290 : vector<1x1xf32> to vector<8x1xf32>
    %292 = arith.addf %289, %291 : vector<8x1xf32>
    %c0_56 = arith.constant 0 : index
    %c0_57 = arith.constant 0 : index
    %293 = vector.load %arg11[%c0_56, %c0_57] : memref<8x1xf32, #tpu.memory_space<vmem>>, vector<8x1xf32>
    tpu.vector_store %arg11[%c0_56, %c0_57], %292 {strides = array<i32>} : memref<8x1xf32, #tpu.memory_space<vmem>>, vector<8x1xf32>,
    return
  }
}

</mosaic_0001>

<llo_original>
// kernel: tpu_custom_call.1
$region0: #{tpu_custom_call.1}
  #allocation0 [shape = 'u32[]', space=smem, size = 0x4, offset = 0x4, fixed_abs, tag = 'smem constant byte address 0x4 - core index']
  #allocation1 [shape = 'u32[144,128]{1,0:T(1,128)}', space=vmem, size = 0x12000, scoped, tag = 'internal scratch']
  #allocation2 [shape = 'f32[1,1]{1,0:T(1,128)S(1)}', space=vmem, size = 0x200, scoped, tag = 'scoped memory for tpu_custom_call.1']
  %s0 = inlined_call_operand.vmem [shape: f32[56,8], index: 0, kind: input, shape index: {}]
  %s1 = inlined_call_operand.vmem [shape: f32[8,2], index: 1, kind: input, shape index: {}]
  %s2 = inlined_call_operand.vmem [shape: f32[32,1], index: 2, kind: input, shape index: {}]
  %s3 = inlined_call_operand.vmem [shape: f32[2,1], index: 3, kind: input, shape index: {}]
  %s4 = inlined_call_operand.<no memory space> [shape: f32[1,1], index: 4, kind: input, shape index: {}]
  %s5 = inlined_call_operand.vmem [shape: f32[8,128], index: 5, kind: input, shape index: {}]
  %s6 = inlined_call_operand.vmem [shape: f32[32,128], index: 6, kind: input, shape index: {}]
  %s7 = inlined_call_operand.vmem [shape: f32[1,128], index: 7, kind: input, shape index: {}]
  %s8 = inlined_call_operand.vmem [shape: f32[32,128], index: 8, kind: input, shape index: {}]
  %s9 = inlined_call_operand.vmem [shape: f32[32,128], index: 9, kind: input, shape index: {}]
  %s10 = inlined_call_operand.vmem [shape: f32[1,128], index: 10, kind: input, shape index: {}]
  %s11 = inlined_call_operand.vmem [shape: f32[8,1], index: 11, kind: output, shape index: {}]
  %s12 = sld [smem:[#allocation0]]
  $region54: #{tpu_custom_call.1} parent=0
    _
  %s14 = ssub.s32 1, %s12
  %s15 = scalar_select 0, %s14, %s12
  %v16 = vstv %s4
  %17 = vst [vmem:[#allocation2] sm:$0x1] %v16
  // Predicated region
  $region2: #{tpu_custom_call.1} parent=0 // pred_check
    _
  $region3: #{tpu_custom_call.1} parent=0 // pred_check_branch
    %19 = sbr.rel (0) target = $region5
  $region4: #{tpu_custom_call.1} parent=0 // pred_region
    _
  $region5: #{tpu_custom_call.1} parent=0 // pred_fallthru
    _
  // Predicated region
  $region6: #{tpu_custom_call.1} parent=0 // pred_check
    _
  $region7: #{tpu_custom_call.1} parent=0 // pred_check_branch
    %21 = sbr.rel (0) target = $region9
  $region8: #{tpu_custom_call.1} parent=0 // pred_region
    _
  $region9: #{tpu_custom_call.1} parent=0 // pred_fallthru
    _
  // Predicated region
  $region10: #{tpu_custom_call.1} parent=0 // pred_check
    _
  $region11: #{tpu_custom_call.1} parent=0 // pred_check_branch
    %23 = sbr.rel (0) target = $region13
  $region12: #{tpu_custom_call.1} parent=0 // pred_region
    _
  $region13: #{tpu_custom_call.1} parent=0 // pred_fallthru
    _
  // Predicated region
  $region14: #{tpu_custom_call.1} parent=0 // pred_check
    _
  $region15: #{tpu_custom_call.1} parent=0 // pred_check_branch
    %25 = sbr.rel (0) target = $region17
  $region16: #{tpu_custom_call.1} parent=0 // pred_region
    _
  $region17: #{tpu_custom_call.1} parent=0 // pred_fallthru
    _
  // Predicated region
  $region18: #{tpu_custom_call.1} parent=0 // pred_check
    _
  $region19: #{tpu_custom_call.1} parent=0 // pred_check_branch
    %27 = sbr.rel (0) target = $region21
  $region20: #{tpu_custom_call.1} parent=0 // pred_region
    _
  $region21: #{tpu_custom_call.1} parent=0 // pred_fallthru
    _
  // Predicated region
  $region22: #{tpu_custom_call.1} parent=0 // pred_check
    _
  $region23: #{tpu_custom_call.1} parent=0 // pred_check_branch
    %29 = sbr.rel (0) target = $region25
  $region24: #{tpu_custom_call.1} parent=0 // pred_region
    _
  $region25: #{tpu_custom_call.1} parent=0 // pred_fallthru
    _
  // Predicated region
  $region26: #{tpu_custom_call.1} parent=0 // pred_check
    _
  $region27: #{tpu_custom_call.1} parent=0 // pred_check_branch
    %31 = sbr.rel (0) target = $region29
  $region28: #{tpu_custom_call.1} parent=0 // pred_region
    _
  $region29: #{tpu_custom_call.1} parent=0 // pred_fallthru
    _
  // Predicated region
  $region30: #{tpu_custom_call.1} parent=0 // pred_check
    _
  $region31: #{tpu_custom_call.1} parent=0 // pred_check_branch
    %33 = sbr.rel (0) target = $region33
  $region32: #{tpu_custom_call.1} parent=0 // pred_region
    _
  $region33: #{tpu_custom_call.1} parent=0 // pred_fallthru
    _
  // Predicated region
  $region34: #{tpu_custom_call.1} parent=0 // pred_check
    _
  $region35: #{tpu_custom_call.1} parent=0 // pred_check_branch
    %35 = sbr.rel (0) target = $region37
  $region36: #{tpu_custom_call.1} parent=0 // pred_region
    _
  $region37: #{tpu_custom_call.1} parent=0 // pred_fallthru
    _
  // Predicated region
  $region38: #{tpu_custom_call.1} parent=0 // pred_check
    _
  $region39: #{tpu_custom_call.1} parent=0 // pred_check_branch
    %37 = sbr.rel (0) target = $region41
  $region40: #{tpu_custom_call.1} parent=0 // pred_region
    _
  $region41: #{tpu_custom_call.1} parent=0 // pred_fallthru
    _
  // Predicated region
  $region42: #{tpu_custom_call.1} parent=0 // pred_check
    _
  $region43: #{tpu_custom_call.1} parent=0 // pred_check_branch
    %39 = sbr.rel (0) target = $region45
  $region44: #{tpu_custom_call.1} parent=0 // pred_region
    _
  $region45: #{tpu_custom_call.1} parent=0 // pred_fallthru
    _
  %v40 = vld [vmem:[%s0] sm:$0xff]
  %v41 = vld [vmem:[%s0 + $0x8] sm:$0xff]
  %v42 = vld [vmem:[%s0 + $0x10] sm:$0xff]
  %v43 = vld [vmem:[%s0 + $0x18] sm:$0xff]
  %v44 = vld [vmem:[%s0 + $0x20] sm:$0xff]
  %v45 = vld [vmem:[%s0 + $0x28] sm:$0xff]
  %v46 = vld [vmem:[%s0 + $0x30] sm:$0xff]
  %v47 = vld [vmem:[%s5] sm:$0xff]
  %v48 = vld [vmem:[%s6] sm:$0xff]
  %v49 = vld [vmem:[%s6 + $0x8] sm:$0xff]
  %v50 = vld [vmem:[%s6 + $0x10] sm:$0xff]
  %v51 = vld [vmem:[%s6 + $0x18] sm:$0xff]
  %v52 = vld [vmem:[%s7] sm:$0x1]
  %v54 = vlaneseq
  %v55 = vshrl.u32 %v54, 7
  %v56 = vsub.s32 0, %v55
  %v57 = vrot.slane %v52, %v56
  %vm59 = vcmask 64512
  %v61 = vsel %vm59, %v40, 0
  %v64 = vsel %vm59, %v41, 0
  %v67 = vsel %vm59, %v42, 0
  %v70 = vsel %vm59, %v43, 0
  %v73 = vsel %vm59, %v44, 0
  %v76 = vsel %vm59, %v45, 0
  %v79 = vsel %vm59, %v46, 0
  %81 = vmatprep.subr.mxu0 0.0
  %82 = vmatpush1.msra.mxu0 %v47
  %83 = vmatprep.subr.mxu0 0.0
  %84 = vmatpush1.msra.mxu0 0.0
  %85 = vmatprep.subr.mxu0 0.0
  %86 = vmatpush1.msra.mxu0 0.0
  %87 = vmatprep.subr.mxu0 0.0
  %88 = vmatpush1.msra.mxu0 0.0
  %89 = vmatprep.subr.mxu0 0.0
  %90 = vmatpush1.msra.mxu0 0.0
  %91 = vmatprep.subr.mxu0 0.0
  %92 = vmatpush1.msra.mxu0 0.0
  %93 = vmatprep.subr.mxu0 0.0
  %94 = vmatpush1.msra.mxu0 0.0
  %95 = vmatprep.subr.mxu0 0.0
  %96 = vmatpush1.msra.mxu0 0.0
  %97 = vmatprep.subr.mxu0 0.0
  %98 = vmatpush1.msra.mxu0 0.0
  %99 = vmatprep.subr.mxu0 0.0
  %100 = vmatpush1.msra.mxu0 0.0
  %101 = vmatprep.subr.mxu0 0.0
  %102 = vmatpush1.msra.mxu0 0.0
  %103 = vmatprep.subr.mxu0 0.0
  %104 = vmatpush1.msra.mxu0 0.0
  %105 = vmatprep.subr.mxu0 0.0
  %106 = vmatpush1.msra.mxu0 0.0
  %107 = vmatprep.subr.mxu0 0.0
  %108 = vmatpush1.msra.mxu0 0.0
  %109 = vmatprep.subr.mxu0 0.0
  %110 = vmatpush1.msra.mxu0 0.0
  %111 = vmatprep.subr.mxu0 0.0
  %112 = vmatpush1.msra.mxu0 0.0
  %113 = vmatprep.subr.mxu0 0.0
  %114 = vmatpush1.msra.mxu0 0.0
  %115 = vmatprep.subr.mxu0 0.0
  %116 = vmatpush1.msra.mxu0 0.0
  %117 = vmatprep.subr.mxu0 0.0
  %118 = vmatpush1.msra.mxu0 0.0
  %119 = vmatprep.subr.mxu0 0.0
  %120 = vmatpush1.msra.mxu0 0.0
  %121 = vmatprep.subr.mxu0 0.0
  %122 = vmatpush1.msra.mxu0 0.0
  %123 = vmatprep.subr.mxu0 0.0
  %124 = vmatpush1.msra.mxu0 0.0
  %125 = vmatprep.subr.mxu0 0.0
  %126 = vmatpush1.msra.mxu0 0.0
  %127 = vmatprep.subr.mxu0 0.0
  %128 = vmatpush1.msra.mxu0 0.0
  %129 = vmatprep.subr.mxu0 0.0
  %130 = vmatpush1.msra.mxu0 0.0
  %131 = vmatprep.subr.mxu0 0.0
  %132 = vmatpush1.msra.mxu0 0.0
  %133 = vmatprep.subr.mxu0 0.0
  %134 = vmatpush1.msra.mxu0 0.0
  %135 = vmatprep.subr.mxu0 0.0
  %136 = vmatpush1.msra.mxu0 0.0
  %137 = vmatprep.subr.mxu0 0.0
  %138 = vmatpush1.msra.mxu0 0.0
  %139 = vmatprep.subr.mxu0 0.0
  %140 = vmatpush1.msra.mxu0 0.0
  %141 = vmatprep.subr.mxu0 0.0
  %142 = vmatpush1.msra.mxu0 0.0
  %143 = vmatprep.subr.mxu0 0.0
  %144 = vmatpush1.msra.mxu0 0.0
  %145 = vmatprep.mubr.f32.mxu0 0.0
  %146 = vmatmul.mubr.f32.gmra.mrb[0].mxu0 %v61
  %v147 = vpop.f32.mrb[0].mxu0
  %v148 = vadd.f32 %v57, %v147
  %v149 = vpop.f32.mrb[0].mxu0
  %150 = vmatprep.mubr.f32.mxu0 0.0
  %151 = vmatmul.mubr.f32.gmra.mrb[0].mxu0 %v64
  %v152 = vpop.f32.mrb[0].mxu0
  %v153 = vadd.f32 %v57, %v152
  %v154 = vpop.f32.mrb[0].mxu0
  %155 = vmatprep.mubr.f32.mxu0 0.0
  %156 = vmatmul.mubr.f32.gmra.mrb[0].mxu0 %v67
  %v157 = vpop.f32.mrb[0].mxu0
  %v158 = vadd.f32 %v57, %v157
  %v159 = vpop.f32.mrb[0].mxu0
  %160 = vmatprep.mubr.f32.mxu0 0.0
  %161 = vmatmul.mubr.f32.gmra.mrb[0].mxu0 %v70
  %v162 = vpop.f32.mrb[0].mxu0
  %v163 = vadd.f32 %v57, %v162
  %v164 = vpop.f32.mrb[0].mxu0
  %165 = vmatprep.mubr.f32.mxu0 0.0
  %166 = vmatmul.mubr.f32.gmra.mrb[0].mxu0 %v73
  %v167 = vpop.f32.mrb[0].mxu0
  %v168 = vadd.f32 %v57, %v167
  %v169 = vpop.f32.mrb[0].mxu0
  %170 = vmatprep.mubr.f32.mxu0 0.0
  %171 = vmatmul.mubr.f32.gmra.mrb[0].mxu0 %v76
  %v172 = vpop.f32.mrb[0].mxu0
  %v173 = vadd.f32 %v57, %v172
  %v174 = vpop.f32.mrb[0].mxu0
  %175 = vmatprep.mubr.f32.mxu0 0.0
  %176 = vmatmul.mubr.f32.gmra.mrb[0].mxu0 %v79
  %v177 = vpop.f32.mrb[0].mxu0
  %v178 = vadd.f32 %v57, %v177
  %v179 = vpop.f32.mrb[0].mxu0
  %180 = vdwg.mxu0
  %vm181 = vcmask 261120
  %v183 = vsel %vm181, 0.0, 0
  %185 = vmatprep.subr.mxu0 0.0
  %186 = vmatpush1.msra.mxu0 %v48
  %187 = vmatprep.subr.mxu0 0.0
  %188 = vmatpush1.msra.mxu0 %v49
  %189 = vmatprep.subr.mxu0 0.0
  %190 = vmatpush1.msra.mxu0 %v50
  %191 = vmatprep.subr.mxu0 0.0
  %192 = vmatpush1.msra.mxu0 %v51
  %193 = vmatprep.subr.mxu0 0.0
  %194 = vmatpush1.msra.mxu0 0.0
  %195 = vmatprep.subr.mxu0 0.0
  %196 = vmatpush1.msra.mxu0 0.0
  %197 = vmatprep.subr.mxu0 0.0
  %198 = vmatpush1.msra.mxu0 0.0
  %199 = vmatprep.subr.mxu0 0.0
  %200 = vmatpush1.msra.mxu0 0.0
  %201 = vmatprep.subr.mxu0 0.0
  %202 = vmatpush1.msra.mxu0 0.0
  %203 = vmatprep.subr.mxu0 0.0
  %204 = vmatpush1.msra.mxu0 0.0
  %205 = vmatprep.subr.mxu0 0.0
  %206 = vmatpush1.msra.mxu0 0.0
  %207 = vmatprep.subr.mxu0 0.0
  %208 = vmatpush1.msra.mxu0 0.0
  %209 = vmatprep.subr.mxu0 0.0
  %210 = vmatpush1.msra.mxu0 0.0
  %211 = vmatprep.subr.mxu0 0.0
  %212 = vmatpush1.msra.mxu0 0.0
  %213 = vmatprep.subr.mxu0 0.0
  %214 = vmatpush1.msra.mxu0 0.0
  %215 = vmatprep.subr.mxu0 0.0
  %216 = vmatpush1.msra.mxu0 0.0
  %217 = vmatprep.subr.mxu0 0.0
  %218 = vmatpush1.msra.mxu0 0.0
  %219 = vmatprep.subr.mxu0 0.0
  %220 = vmatpush1.msra.mxu0 0.0
  %221 = vmatprep.subr.mxu0 0.0
  %222 = vmatpush1.msra.mxu0 0.0
  %223 = vmatprep.subr.mxu0 0.0
  %224 = vmatpush1.msra.mxu0 0.0
  %225 = vmatprep.subr.mxu0 0.0
  %226 = vmatpush1.msra.mxu0 0.0
  %227 = vmatprep.subr.mxu0 0.0
  %228 = vmatpush1.msra.mxu0 0.0
  %229 = vmatprep.subr.mxu0 0.0
  %230 = vmatpush1.msra.mxu0 0.0
  %231 = vmatprep.subr.mxu0 0.0
  %232 = vmatpush1.msra.mxu0 0.0
  %233 = vmatprep.subr.mxu0 0.0
  %234 = vmatpush1.msra.mxu0 0.0
  %235 = vmatprep.subr.mxu0 0.0
  %236 = vmatpush1.msra.mxu0 0.0
  %237 = vmatprep.subr.mxu0 0.0
  %238 = vmatpush1.msra.mxu0 0.0
  %239 = vmatprep.subr.mxu0 0.0
  %240 = vmatpush1.msra.mxu0 0.0
  %241 = vmatprep.subr.mxu0 0.0
  %242 = vmatpush1.msra.mxu0 0.0
  %243 = vmatprep.subr.mxu0 0.0
  %244 = vmatpush1.msra.mxu0 0.0
  %245 = vmatprep.subr.mxu0 0.0
  %246 = vmatpush1.msra.mxu0 0.0
  %247 = vmatprep.subr.mxu0 0.0
  %248 = vmatpush1.msra.mxu0 0.0
  %249 = vmatprep.mubr.f32.mxu0 0.0
  %250 = vmatmul.mubr.f32.gmra.mrb[0].mxu0 %v183
  %v251 = vpop.f32.mrb[0].mxu0
  %v252 = vadd.f32 0.0, %v251
  %v253 = vpop.f32.mrb[0].mxu0
  %254 = vdwg.mxu0
  %v255 = vadd.f32 %v148, %v252
  %v256 = vxor.u32 %v255, 2147483648
  %v257 = vmul.f32 %v256, 1.442695
  %v258 = vpow.pop %v257
  %v259 = vadd.f32 %v258, 1.0
  %v260 = vrcp.pop %v259
  %v261 = vmul.f32 1.0, %v260
  %v262 = vtanh.pop %v255
  %v263 = vmul.f32 %v261, 0.0
  %265 = vrot.lane.b32.xlu0 %v262, 32
  %v266 = vpop.permute.xlu0 %265
  %v268 = vmul.f32 %v261, %v266
  %270 = vrot.lane.b32.xlu0 %v268, 32
  %v271 = vpop.permute.xlu0 %270
  %v273 = vadd.f32 %v263, %v271
  %v274 = vtanh.pop %v273
  %276 = vrot.lane.b32.xlu0 %v274, 32
  %v277 = vpop.permute.xlu0 %276
  %v279 = vmul.f32 %v261, %v277
  %281 = vrot.lane.b32.xlu0 %v279, 64
  %v282 = vpop.permute.xlu0 %281
  %v283 = vsel %vm181, %v282, 0
  %285 = vmatprep.subr.mxu0 0.0
  %286 = vmatpush1.msra.mxu0 %v48
  %287 = vmatprep.subr.mxu0 0.0
  %288 = vmatpush1.msra.mxu0 %v49
  %289 = vmatprep.subr.mxu0 0.0
  %290 = vmatpush1.msra.mxu0 %v50
  %291 = vmatprep.subr.mxu0 0.0
  %292 = vmatpush1.msra.mxu0 %v51
  %293 = vmatprep.subr.mxu0 0.0
  %294 = vmatpush1.msra.mxu0 0.0
  %295 = vmatprep.subr.mxu0 0.0
  %296 = vmatpush1.msra.mxu0 0.0
  %297 = vmatprep.subr.mxu0 0.0
  %298 = vmatpush1.msra.mxu0 0.0
  %299 = vmatprep.subr.mxu0 0.0
  %300 = vmatpush1.msra.mxu0 0.0
  %301 = vmatprep.subr.mxu0 0.0
  %302 = vmatpush1.msra.mxu0 0.0
  %303 = vmatprep.subr.mxu0 0.0
  %304 = vmatpush1.msra.mxu0 0.0
  %305 = vmatprep.subr.mxu0 0.0
  %306 = vmatpush1.msra.mxu0 0.0
  %307 = vmatprep.subr.mxu0 0.0
  %308 = vmatpush1.msra.mxu0 0.0
  %309 = vmatprep.subr.mxu0 0.0
  %310 = vmatpush1.msra.mxu0 0.0
  %311 = vmatprep.subr.mxu0 0.0
  %312 = vmatpush1.msra.mxu0 0.0
  %313 = vmatprep.subr.mxu0 0.0
  %314 = vmatpush1.msra.mxu0 0.0
  %315 = vmatprep.subr.mxu0 0.0
  %316 = vmatpush1.msra.mxu0 0.0
  %317 = vmatprep.subr.mxu0 0.0
  %318 = vmatpush1.msra.mxu0 0.0
  %319 = vmatprep.subr.mxu0 0.0
  %320 = vmatpush1.msra.mxu0 0.0
  %321 = vmatprep.subr.mxu0 0.0
  %322 = vmatpush1.msra.mxu0 0.0
  %323 = vmatprep.subr.mxu0 0.0
  %324 = vmatpush1.msra.mxu0 0.0
  %325 = vmatprep.subr.mxu0 0.0
  %326 = vmatpush1.msra.mxu0 0.0
  %327 = vmatprep.subr.mxu0 0.0
  %328 = vmatpush1.msra.mxu0 0.0
  %329 = vmatprep.subr.mxu0 0.0
  %330 = vmatpush1.msra.mxu0 0.0
  %331 = vmatprep.subr.mxu0 0.0
  %332 = vmatpush1.msra.mxu0 0.0
  %333 = vmatprep.subr.mxu0 0.0
  %334 = vmatpush1.msra.mxu0 0.0
  %335 = vmatprep.subr.mxu0 0.0
  %336 = vmatpush1.msra.mxu0 0.0
  %337 = vmatprep.subr.mxu0 0.0
  %338 = vmatpush1.msra.mxu0 0.0
  %339 = vmatprep.subr.mxu0 0.0
  %340 = vmatpush1.msra.mxu0 0.0
  %341 = vmatprep.subr.mxu0 0.0
  %342 = vmatpush1.msra.mxu0 0.0
  %343 = vmatprep.subr.mxu0 0.0
  %344 = vmatpush1.msra.mxu0 0.0
  %345 = vmatprep.subr.mxu0 0.0
  %346 = vmatpush1.msra.mxu0 0.0
  %347 = vmatprep.subr.mxu0 0.0
  %348 = vmatpush1.msra.mxu0 0.0
  %349 = vmatprep.mubr.f32.mxu0 0.0
  %350 = vmatmul.mubr.f32.gmra.mrb[0].mxu0 %v283
  %v351 = vpop.f32.mrb[0].mxu0
  %v352 = vadd.f32 0.0, %v351
  %v353 = vpop.f32.mrb[0].mxu0
  %354 = vdwg.mxu0
  %v355 = vadd.f32 %v153, %v352
  %v356 = vxor.u32 %v355, 2147483648
  %v357 = vmul.f32 %v356, 1.442695
  %v358 = vpow.pop %v357
  %v359 = vadd.f32 %v358, 1.0
  %v360 = vrcp.pop %v359
  %v361 = vmul.f32 1.0, %v360
  %v362 = vtanh.pop %v355
  %v363 = vmul.f32 %v361, %v273
  %365 = vrot.lane.b32.xlu0 %v362, 32
  %v366 = vpop.permute.xlu0 %365
  %v368 = vmul.f32 %v361, %v366
  %370 = vrot.lane.b32.xlu0 %v368, 32
  %v371 = vpop.permute.xlu0 %370
  %v373 = vadd.f32 %v363, %v371
  %v374 = vtanh.pop %v373
  %376 = vrot.lane.b32.xlu0 %v374, 32
  %v377 = vpop.permute.xlu0 %376
  %v379 = vmul.f32 %v361, %v377
  %381 = vrot.lane.b32.xlu0 %v379, 64
  %v382 = vpop.permute.xlu0 %381
  %v383 = vsel %vm181, %v382, 0
  %385 = vmatprep.subr.mxu0 0.0
  %386 = vmatpush1.msra.mxu0 %v48
  %387 = vmatprep.subr.mxu0 0.0
  %388 = vmatpush1.msra.mxu0 %v49
  %389 = vmatprep.subr.mxu0 0.0
  %390 = vmatpush1.msra.mxu0 %v50
  %391 = vmatprep.subr.mxu0 0.0
  %392 = vmatpush1.msra.mxu0 %v51
  %393 = vmatprep.subr.mxu0 0.0
  %394 = vmatpush1.msra.mxu0 0.0
  %395 = vmatprep.subr.mxu0 0.0
  %396 = vmatpush1.msra.mxu0 0.0
  %397 = vmatprep.subr.mxu0 0.0
  %398 = vmatpush1.msra.mxu0 0.0
  %399 = vmatprep.subr.mxu0 0.0
  %400 = vmatpush1.msra.mxu0 0.0
  %401 = vmatprep.subr.mxu0 0.0
  %402 = vmatpush1.msra.mxu0 0.0
  %403 = vmatprep.subr.mxu0 0.0
  %404 = vmatpush1.msra.mxu0 0.0
  %405 = vmatprep.subr.mxu0 0.0
  %406 = vmatpush1.msra.mxu0 0.0
  %407 = vmatprep.subr.mxu0 0.0
  %408 = vmatpush1.msra.mxu0 0.0
  %409 = vmatprep.subr.mxu0 0.0
  %410 = vmatpush1.msra.mxu0 0.0
  %411 = vmatprep.subr.mxu0 0.0
  %412 = vmatpush1.msra.mxu0 0.0
  %413 = vmatprep.subr.mxu0 0.0
  %414 = vmatpush1.msra.mxu0 0.0
  %415 = vmatprep.subr.mxu0 0.0
  %416 = vmatpush1.msra.mxu0 0.0
  %417 = vmatprep.subr.mxu0 0.0
  %418 = vmatpush1.msra.mxu0 0.0
  %419 = vmatprep.subr.mxu0 0.0
  %420 = vmatpush1.msra.mxu0 0.0
  %421 = vmatprep.subr.mxu0 0.0
  %422 = vmatpush1.msra.mxu0 0.0
  %423 = vmatprep.subr.mxu0 0.0
  %424 = vmatpush1.msra.mxu0 0.0
  %425 = vmatprep.subr.mxu0 0.0
  %426 = vmatpush1.msra.mxu0 0.0
  %427 = vmatprep.subr.mxu0 0.0
  %428 = vmatpush1.msra.mxu0 0.0
  %429 = vmatprep.subr.mxu0 0.0
  %430 = vmatpush1.msra.mxu0 0.0
  %431 = vmatprep.subr.mxu0 0.0
  %432 = vmatpush1.msra.mxu0 0.0
  %433 = vmatprep.subr.mxu0 0.0
  %434 = vmatpush1.msra.mxu0 0.0
  %435 = vmatprep.subr.mxu0 0.0
  %436 = vmatpush1.msra.mxu0 0.0
  %437 = vmatprep.subr.mxu0 0.0
  %438 = vmatpush1.msra.mxu0 0.0
  %439 = vmatprep.subr.mxu0 0.0
  %440 = vmatpush1.msra.mxu0 0.0
  %441 = vmatprep.subr.mxu0 0.0
  %442 = vmatpush1.msra.mxu0 0.0
  %443 = vmatprep.subr.mxu0 0.0
  %444 = vmatpush1.msra.mxu0 0.0
  %445 = vmatprep.subr.mxu0 0.0
  %446 = vmatpush1.msra.mxu0 0.0
  %447 = vmatprep.subr.mxu0 0.0
  %448 = vmatpush1.msra.mxu0 0.0
  %449 = vmatprep.mubr.f32.mxu0 0.0
  %450 = vmatmul.mubr.f32.gmra.mrb[0].mxu0 %v383
  %v451 = vpop.f32.mrb[0].mxu0
  %v452 = vadd.f32 0.0, %v451
  %v453 = vpop.f32.mrb[0].mxu0
  %454 = vdwg.mxu0
  %v455 = vadd.f32 %v158, %v452
  %v456 = vxor.u32 %v455, 2147483648
  %v457 = vmul.f32 %v456, 1.442695
  %v458 = vpow.pop %v457
  %v459 = vadd.f32 %v458, 1.0
  %v460 = vrcp.pop %v459
  %v461 = vmul.f32 1.0, %v460
  %v462 = vtanh.pop %v455
  %v463 = vmul.f32 %v461, %v373
  %465 = vrot.lane.b32.xlu0 %v462, 32
  %v466 = vpop.permute.xlu0 %465
  %v468 = vmul.f32 %v461, %v466
  %470 = vrot.lane.b32.xlu0 %v468, 32
  %v471 = vpop.permute.xlu0 %470
  %v473 = vadd.f32 %v463, %v471
  %v474 = vtanh.pop %v473
  %476 = vrot.lane.b32.xlu0 %v474, 32
  %v477 = vpop.permute.xlu0 %476
  %v479 = vmul.f32 %v461, %v477
  %481 = vrot.lane.b32.xlu0 %v479, 64
  %v482 = vpop.permute.xlu0 %481
  %v483 = vsel %vm181, %v482, 0
  %485 = vmatprep.subr.mxu0 0.0
  %486 = vmatpush1.msra.mxu0 %v48
  %487 = vmatprep.subr.mxu0 0.0
  %488 = vmatpush1.msra.mxu0 %v49
  %489 = vmatprep.subr.mxu0 0.0
  %490 = vmatpush1.msra.mxu0 %v50
  %491 = vmatprep.subr.mxu0 0.0
  %492 = vmatpush1.msra.mxu0 %v51
  %493 = vmatprep.subr.mxu0 0.0
  %494 = vmatpush1.msra.mxu0 0.0
  %495 = vmatprep.subr.mxu0 0.0
  %496 = vmatpush1.msra.mxu0 0.0
  %497 = vmatprep.subr.mxu0 0.0
  %498 = vmatpush1.msra.mxu0 0.0
  %499 = vmatprep.subr.mxu0 0.0
  %500 = vmatpush1.msra.mxu0 0.0
  %501 = vmatprep.subr.mxu0 0.0
  %502 = vmatpush1.msra.mxu0 0.0
  %503 = vmatprep.subr.mxu0 0.0
  %504 = vmatpush1.msra.mxu0 0.0
  %505 = vmatprep.subr.mxu0 0.0
  %506 = vmatpush1.msra.mxu0 0.0
  %507 = vmatprep.subr.mxu0 0.0
  %508 = vmatpush1.msra.mxu0 0.0
  %509 = vmatprep.subr.mxu0 0.0
  %510 = vmatpush1.msra.mxu0 0.0
  %511 = vmatprep.subr.mxu0 0.0
  %512 = vmatpush1.msra.mxu0 0.0
  %513 = vmatprep.subr.mxu0 0.0
  %514 = vmatpush1.msra.mxu0 0.0
  %515 = vmatprep.subr.mxu0 0.0
  %516 = vmatpush1.msra.mxu0 0.0
  %517 = vmatprep.subr.mxu0 0.0
  %518 = vmatpush1.msra.mxu0 0.0
  %519 = vmatprep.subr.mxu0 0.0
  %520 = vmatpush1.msra.mxu0 0.0
  %521 = vmatprep.subr.mxu0 0.0
  %522 = vmatpush1.msra.mxu0 0.0
  %523 = vmatprep.subr.mxu0 0.0
  %524 = vmatpush1.msra.mxu0 0.0
  %525 = vmatprep.subr.mxu0 0.0
  %526 = vmatpush1.msra.mxu0 0.0
  %527 = vmatprep.subr.mxu0 0.0
  %528 = vmatpush1.msra.mxu0 0.0
  %529 = vmatprep.subr.mxu0 0.0
  %530 = vmatpush1.msra.mxu0 0.0
  %531 = vmatprep.subr.mxu0 0.0
  %532 = vmatpush1.msra.mxu0 0.0
  %533 = vmatprep.subr.mxu0 0.0
  %534 = vmatpush1.msra.mxu0 0.0
  %535 = vmatprep.subr.mxu0 0.0
  %536 = vmatpush1.msra.mxu0 0.0
  %537 = vmatprep.subr.mxu0 0.0
  %538 = vmatpush1.msra.mxu0 0.0
  %539 = vmatprep.subr.mxu0 0.0
  %540 = vmatpush1.msra.mxu0 0.0
  %541 = vmatprep.subr.mxu0 0.0
  %542 = vmatpush1.msra.mxu0 0.0
  %543 = vmatprep.subr.mxu0 0.0
  %544 = vmatpush1.msra.mxu0 0.0
  %545 = vmatprep.subr.mxu0 0.0
  %546 = vmatpush1.msra.mxu0 0.0
  %547 = vmatprep.subr.mxu0 0.0
  %548 = vmatpush1.msra.mxu0 0.0
  %549 = vmatprep.mubr.f32.mxu0 0.0
  %550 = vmatmul.mubr.f32.gmra.mrb[0].mxu0 %v483
  %v551 = vpop.f32.mrb[0].mxu0
  %v552 = vadd.f32 0.0, %v551
  %v553 = vpop.f32.mrb[0].mxu0
  %554 = vdwg.mxu0
  %v555 = vadd.f32 %v163, %v552
  %v556 = vxor.u32 %v555, 2147483648
  %v557 = vmul.f32 %v556, 1.442695
  %v558 = vpow.pop %v557
  %v559 = vadd.f32 %v558, 1.0
  %v560 = vrcp.pop %v559
  %v561 = vmul.f32 1.0, %v560
  %v562 = vtanh.pop %v555
  %v563 = vmul.f32 %v561, %v473
  %565 = vrot.lane.b32.xlu0 %v562, 32
  %v566 = vpop.permute.xlu0 %565
  %v568 = vmul.f32 %v561, %v566
  %570 = vrot.lane.b32.xlu0 %v568, 32
  %v571 = vpop.permute.xlu0 %570
  %v573 = vadd.f32 %v563, %v571
  %v574 = vtanh.pop %v573
  %576 = vrot.lane.b32.xlu0 %v574, 32
  %v577 = vpop.permute.xlu0 %576
  %v579 = vmul.f32 %v561, %v577
  %581 = vrot.lane.b32.xlu0 %v579, 64
  %v582 = vpop.permute.xlu0 %581
  %v583 = vsel %vm181, %v582, 0
  %585 = vmatprep.subr.mxu0 0.0
  %586 = vmatpush1.msra.mxu0 %v48
  %587 = vmatprep.subr.mxu0 0.0
  %588 = vmatpush1.msra.mxu0 %v49
  %589 = vmatprep.subr.mxu0 0.0
  %590 = vmatpush1.msra.mxu0 %v50
  %591 = vmatprep.subr.mxu0 0.0
  %592 = vmatpush1.msra.mxu0 %v51
  %593 = vmatprep.subr.mxu0 0.0
  %594 = vmatpush1.msra.mxu0 0.0
  %595 = vmatprep.subr.mxu0 0.0
  %596 = vmatpush1.msra.mxu0 0.0
  %597 = vmatprep.subr.mxu0 0.0
  %598 = vmatpush1.msra.mxu0 0.0
  %599 = vmatprep.subr.mxu0 0.0
  %600 = vmatpush1.msra.mxu0 0.0
  %601 = vmatprep.subr.mxu0 0.0
  %602 = vmatpush1.msra.mxu0 0.0
  %603 = vmatprep.subr.mxu0 0.0
  %604 = vmatpush1.msra.mxu0 0.0
  %605 = vmatprep.subr.mxu0 0.0
  %606 = vmatpush1.msra.mxu0 0.0
  %607 = vmatprep.subr.mxu0 0.0
  %608 = vmatpush1.msra.mxu0 0.0
  %609 = vmatprep.subr.mxu0 0.0
  %610 = vmatpush1.msra.mxu0 0.0
  %611 = vmatprep.subr.mxu0 0.0
  %612 = vmatpush1.msra.mxu0 0.0
  %613 = vmatprep.subr.mxu0 0.0
  %614 = vmatpush1.msra.mxu0 0.0
  %615 = vmatprep.subr.mxu0 0.0
  %616 = vmatpush1.msra.mxu0 0.0
  %617 = vmatprep.subr.mxu0 0.0
  %618 = vmatpush1.msra.mxu0 0.0
  %619 = vmatprep.subr.mxu0 0.0
  %620 = vmatpush1.msra.mxu0 0.0
  %621 = vmatprep.subr.mxu0 0.0
  %622 = vmatpush1.msra.mxu0 0.0
  %623 = vmatprep.subr.mxu0 0.0
  %624 = vmatpush1.msra.mxu0 0.0
  %625 = vmatprep.subr.mxu0 0.0
  %626 = vmatpush1.msra.mxu0 0.0
  %627 = vmatprep.subr.mxu0 0.0
  %628 = vmatpush1.msra.mxu0 0.0
  %629 = vmatprep.subr.mxu0 0.0
  %630 = vmatpush1.msra.mxu0 0.0
  %631 = vmatprep.subr.mxu0 0.0
  %632 = vmatpush1.msra.mxu0 0.0
  %633 = vmatprep.subr.mxu0 0.0
  %634 = vmatpush1.msra.mxu0 0.0
  %635 = vmatprep.subr.mxu0 0.0
  %636 = vmatpush1.msra.mxu0 0.0
  %637 = vmatprep.subr.mxu0 0.0
  %638 = vmatpush1.msra.mxu0 0.0
  %639 = vmatprep.subr.mxu0 0.0
  %640 = vmatpush1.msra.mxu0 0.0
  %641 = vmatprep.subr.mxu0 0.0
  %642 = vmatpush1.msra.mxu0 0.0
  %643 = vmatprep.subr.mxu0 0.0
  %644 = vmatpush1.msra.mxu0 0.0
  %645 = vmatprep.subr.mxu0 0.0
  %646 = vmatpush1.msra.mxu0 0.0
  %647 = vmatprep.subr.mxu0 0.0
  %648 = vmatpush1.msra.mxu0 0.0
  %649 = vmatprep.mubr.f32.mxu0 0.0
  %650 = vmatmul.mubr.f32.gmra.mrb[0].mxu0 %v583
  %v651 = vpop.f32.mrb[0].mxu0
  %v652 = vadd.f32 0.0, %v651
  %v653 = vpop.f32.mrb[0].mxu0
  %654 = vdwg.mxu0
  %v655 = vadd.f32 %v168, %v652
  %v656 = vxor.u32 %v655, 2147483648
  %v657 = vmul.f32 %v656, 1.442695
  %v658 = vpow.pop %v657
  %v659 = vadd.f32 %v658, 1.0
  %v660 = vrcp.pop %v659
  %v661 = vmul.f32 1.0, %v660
  %v662 = vtanh.pop %v655
  %v663 = vmul.f32 %v661, %v573
  %665 = vrot.lane.b32.xlu0 %v662, 32
  %v666 = vpop.permute.xlu0 %665
  %v668 = vmul.f32 %v661, %v666
  %670 = vrot.lane.b32.xlu0 %v668, 32
  %v671 = vpop.permute.xlu0 %670
  %v673 = vadd.f32 %v663, %v671
  %v674 = vtanh.pop %v673
  %676 = vrot.lane.b32.xlu0 %v674, 32
  %v677 = vpop.permute.xlu0 %676
  %v679 = vmul.f32 %v661, %v677
  %681 = vrot.lane.b32.xlu0 %v679, 64
  %v682 = vpop.permute.xlu0 %681
  %v683 = vsel %vm181, %v682, 0
  %685 = vmatprep.subr.mxu0 0.0
  %686 = vmatpush1.msra.mxu0 %v48
  %687 = vmatprep.subr.mxu0 0.0
  %688 = vmatpush1.msra.mxu0 %v49
  %689 = vmatprep.subr.mxu0 0.0
  %690 = vmatpush1.msra.mxu0 %v50
  %691 = vmatprep.subr.mxu0 0.0
  %692 = vmatpush1.msra.mxu0 %v51
  %693 = vmatprep.subr.mxu0 0.0
  %694 = vmatpush1.msra.mxu0 0.0
  %695 = vmatprep.subr.mxu0 0.0
  %696 = vmatpush1.msra.mxu0 0.0
  %697 = vmatprep.subr.mxu0 0.0
  %698 = vmatpush1.msra.mxu0 0.0
  %699 = vmatprep.subr.mxu0 0.0
  %700 = vmatpush1.msra.mxu0 0.0
  %701 = vmatprep.subr.mxu0 0.0
  %702 = vmatpush1.msra.mxu0 0.0
  %703 = vmatprep.subr.mxu0 0.0
  %704 = vmatpush1.msra.mxu0 0.0
  %705 = vmatprep.subr.mxu0 0.0
  %706 = vmatpush1.msra.mxu0 0.0
  %707 = vmatprep.subr.mxu0 0.0
  %708 = vmatpush1.msra.mxu0 0.0
  %709 = vmatprep.subr.mxu0 0.0
  %710 = vmatpush1.msra.mxu0 0.0
  %711 = vmatprep.subr.mxu0 0.0
  %712 = vmatpush1.msra.mxu0 0.0
  %713 = vmatprep.subr.mxu0 0.0
  %714 = vmatpush1.msra.mxu0 0.0
  %715 = vmatprep.subr.mxu0 0.0
  %716 = vmatpush1.msra.mxu0 0.0
  %717 = vmatprep.subr.mxu0 0.0
  %718 = vmatpush1.msra.mxu0 0.0
  %719 = vmatprep.subr.mxu0 0.0
  %720 = vmatpush1.msra.mxu0 0.0
  %721 = vmatprep.subr.mxu0 0.0
  %722 = vmatpush1.msra.mxu0 0.0
  %723 = vmatprep.subr.mxu0 0.0
  %724 = vmatpush1.msra.mxu0 0.0
  %725 = vmatprep.subr.mxu0 0.0
  %726 = vmatpush1.msra.mxu0 0.0
  %727 = vmatprep.subr.mxu0 0.0
  %728 = vmatpush1.msra.mxu0 0.0
  %729 = vmatprep.subr.mxu0 0.0
  %730 = vmatpush1.msra.mxu0 0.0
  %731 = vmatprep.subr.mxu0 0.0
  %732 = vmatpush1.msra.mxu0 0.0
  %733 = vmatprep.subr.mxu0 0.0
  %734 = vmatpush1.msra.mxu0 0.0
  %735 = vmatprep.subr.mxu0 0.0
  %736 = vmatpush1.msra.mxu0 0.0
  %737 = vmatprep.subr.mxu0 0.0
  %738 = vmatpush1.msra.mxu0 0.0
  %739 = vmatprep.subr.mxu0 0.0
  %740 = vmatpush1.msra.mxu0 0.0
  %741 = vmatprep.subr.mxu0 0.0
  %742 = vmatpush1.msra.mxu0 0.0
  %743 = vmatprep.subr.mxu0 0.0
  %744 = vmatpush1.msra.mxu0 0.0
  %745 = vmatprep.subr.mxu0 0.0
  %746 = vmatpush1.msra.mxu0 0.0
  %747 = vmatprep.subr.mxu0 0.0
  %748 = vmatpush1.msra.mxu0 0.0
  %749 = vmatprep.mubr.f32.mxu0 0.0
  %750 = vmatmul.mubr.f32.gmra.mrb[0].mxu0 %v683
  %v751 = vpop.f32.mrb[0].mxu0
  %v752 = vadd.f32 0.0, %v751
  %v753 = vpop.f32.mrb[0].mxu0
  %754 = vdwg.mxu0
  %v755 = vadd.f32 %v173, %v752
  %v756 = vxor.u32 %v755, 2147483648
  %v757 = vmul.f32 %v756, 1.442695
  %v758 = vpow.pop %v757
  %v759 = vadd.f32 %v758, 1.0
  %v760 = vrcp.pop %v759
  %v761 = vmul.f32 1.0, %v760
  %v762 = vtanh.pop %v755
  %v763 = vmul.f32 %v761, %v673
  %765 = vrot.lane.b32.xlu0 %v762, 32
  %v766 = vpop.permute.xlu0 %765
  %v768 = vmul.f32 %v761, %v766
  %770 = vrot.lane.b32.xlu0 %v768, 32
  %v771 = vpop.permute.xlu0 %770
  %v773 = vadd.f32 %v763, %v771
  %v774 = vtanh.pop %v773
  %776 = vrot.lane.b32.xlu0 %v774, 32
  %v777 = vpop.permute.xlu0 %776
  %v779 = vmul.f32 %v761, %v777
  %781 = vrot.lane.b32.xlu0 %v779, 64
  %v782 = vpop.permute.xlu0 %781
  %v783 = vsel %vm181, %v782, 0
  %785 = vmatprep.subr.mxu0 0.0
  %786 = vmatpush1.msra.mxu0 %v48
  %787 = vmatprep.subr.mxu0 0.0
  %788 = vmatpush1.msra.mxu0 %v49
  %789 = vmatprep.subr.mxu0 0.0
  %790 = vmatpush1.msra.mxu0 %v50
  %791 = vmatprep.subr.mxu0 0.0
  %792 = vmatpush1.msra.mxu0 %v51
  %793 = vmatprep.subr.mxu0 0.0
  %794 = vmatpush1.msra.mxu0 0.0
  %795 = vmatprep.subr.mxu0 0.0
  %796 = vmatpush1.msra.mxu0 0.0
  %797 = vmatprep.subr.mxu0 0.0
  %798 = vmatpush1.msra.mxu0 0.0
  %799 = vmatprep.subr.mxu0 0.0
  %800 = vmatpush1.msra.mxu0 0.0
  %801 = vmatprep.subr.mxu0 0.0
  %802 = vmatpush1.msra.mxu0 0.0
  %803 = vmatprep.subr.mxu0 0.0
  %804 = vmatpush1.msra.mxu0 0.0
  %805 = vmatprep.subr.mxu0 0.0
  %806 = vmatpush1.msra.mxu0 0.0
  %807 = vmatprep.subr.mxu0 0.0
  %808 = vmatpush1.msra.mxu0 0.0
  %809 = vmatprep.subr.mxu0 0.0
  %810 = vmatpush1.msra.mxu0 0.0
  %811 = vmatprep.subr.mxu0 0.0
  %812 = vmatpush1.msra.mxu0 0.0
  %813 = vmatprep.subr.mxu0 0.0
  %814 = vmatpush1.msra.mxu0 0.0
  %815 = vmatprep.subr.mxu0 0.0
  %816 = vmatpush1.msra.mxu0 0.0
  %817 = vmatprep.subr.mxu0 0.0
  %818 = vmatpush1.msra.mxu0 0.0
  %819 = vmatprep.subr.mxu0 0.0
  %820 = vmatpush1.msra.mxu0 0.0
  %821 = vmatprep.subr.mxu0 0.0
  %822 = vmatpush1.msra.mxu0 0.0
  %823 = vmatprep.subr.mxu0 0.0
  %824 = vmatpush1.msra.mxu0 0.0
  %825 = vmatprep.subr.mxu0 0.0
  %826 = vmatpush1.msra.mxu0 0.0
  %827 = vmatprep.subr.mxu0 0.0
  %828 = vmatpush1.msra.mxu0 0.0
  %829 = vmatprep.subr.mxu0 0.0
  %830 = vmatpush1.msra.mxu0 0.0
  %831 = vmatprep.subr.mxu0 0.0
  %832 = vmatpush1.msra.mxu0 0.0
  %833 = vmatprep.subr.mxu0 0.0
  %834 = vmatpush1.msra.mxu0 0.0
  %835 = vmatprep.subr.mxu0 0.0
  %836 = vmatpush1.msra.mxu0 0.0
  %837 = vmatprep.subr.mxu0 0.0
  %838 = vmatpush1.msra.mxu0 0.0
  %839 = vmatprep.subr.mxu0 0.0
  %840 = vmatpush1.msra.mxu0 0.0
  %841 = vmatprep.subr.mxu0 0.0
  %842 = vmatpush1.msra.mxu0 0.0
  %843 = vmatprep.subr.mxu0 0.0
  %844 = vmatpush1.msra.mxu0 0.0
  %845 = vmatprep.subr.mxu0 0.0
  %846 = vmatpush1.msra.mxu0 0.0
  %847 = vmatprep.subr.mxu0 0.0
  %848 = vmatpush1.msra.mxu0 0.0
  %849 = vmatprep.mubr.f32.mxu0 0.0
  %850 = vmatmul.mubr.f32.gmra.mrb[0].mxu0 %v783
  %v851 = vpop.f32.mrb[0].mxu0
  %v852 = vadd.f32 0.0, %v851
  %v853 = vpop.f32.mrb[0].mxu0
  %854 = vdwg.mxu0
  %v855 = vadd.f32 %v178, %v852
  %v856 = vxor.u32 %v855, 2147483648
  %v857 = vmul.f32 %v856, 1.442695
  %v858 = vpow.pop %v857
  %v859 = vadd.f32 %v858, 1.0
  %v860 = vrcp.pop %v859
  %v861 = vmul.f32 1.0, %v860
  %v862 = vtanh.pop %v855
  %v863 = vmul.f32 %v861, %v773
  %865 = vrot.lane.b32.xlu0 %v862, 32
  %v866 = vpop.permute.xlu0 %865
  %v868 = vmul.f32 %v861, %v866
  %870 = vrot.lane.b32.xlu0 %v868, 32
  %v871 = vpop.permute.xlu0 %870
  %v873 = vadd.f32 %v863, %v871
  %v874 = vtanh.pop %v873
  %876 = vrot.lane.b32.xlu0 %v874, 32
  %v877 = vpop.permute.xlu0 %876
  %v879 = vmul.f32 %v861, %v877
  %v880 = vld [vmem:[%s8] sm:$0xff]
  %v881 = vld [vmem:[%s8 + $0x8] sm:$0xff]
  %v882 = vld [vmem:[%s8 + $0x10] sm:$0xff]
  %v883 = vld [vmem:[%s8 + $0x18] sm:$0xff]
  %v884 = vld [vmem:[%s9] sm:$0xff]
  %v885 = vld [vmem:[%s9 + $0x8] sm:$0xff]
  %v886 = vld [vmem:[%s9 + $0x10] sm:$0xff]
  %v887 = vld [vmem:[%s9 + $0x18] sm:$0xff]
  %v888 = vld [vmem:[%s10] sm:$0x1]
  %v890 = vlaneseq
  %v891 = vshrl.u32 %v890, 7
  %v892 = vsub.s32 0, %v891
  %v893 = vrot.slane %v888, %v892
  %896 = vrot.lane.b32.xlu0 %v879, 64
  %v897 = vpop.permute.xlu0 %896
  %v898 = vsel %vm181, %v897, 0
  %900 = vmatprep.subr.mxu0 0.0
  %901 = vmatpush1.msra.mxu0 %v880
  %902 = vmatprep.subr.mxu0 0.0
  %903 = vmatpush1.msra.mxu0 %v881
  %904 = vmatprep.subr.mxu0 0.0
  %905 = vmatpush1.msra.mxu0 %v882
  %906 = vmatprep.subr.mxu0 0.0
  %907 = vmatpush1.msra.mxu0 %v883
  %908 = vmatprep.subr.mxu0 0.0
  %909 = vmatpush1.msra.mxu0 0.0
  %910 = vmatprep.subr.mxu0 0.0
  %911 = vmatpush1.msra.mxu0 0.0
  %912 = vmatprep.subr.mxu0 0.0
  %913 = vmatpush1.msra.mxu0 0.0
  %914 = vmatprep.subr.mxu0 0.0
  %915 = vmatpush1.msra.mxu0 0.0
  %916 = vmatprep.subr.mxu0 0.0
  %917 = vmatpush1.msra.mxu0 0.0
  %918 = vmatprep.subr.mxu0 0.0
  %919 = vmatpush1.msra.mxu0 0.0
  %920 = vmatprep.subr.mxu0 0.0
  %921 = vmatpush1.msra.mxu0 0.0
  %922 = vmatprep.subr.mxu0 0.0
  %923 = vmatpush1.msra.mxu0 0.0
  %924 = vmatprep.subr.mxu0 0.0
  %925 = vmatpush1.msra.mxu0 0.0
  %926 = vmatprep.subr.mxu0 0.0
  %927 = vmatpush1.msra.mxu0 0.0
  %928 = vmatprep.subr.mxu0 0.0
  %929 = vmatpush1.msra.mxu0 0.0
  %930 = vmatprep.subr.mxu0 0.0
  %931 = vmatpush1.msra.mxu0 0.0
  %932 = vmatprep.subr.mxu0 0.0
  %933 = vmatpush1.msra.mxu0 0.0
  %934 = vmatprep.subr.mxu0 0.0
  %935 = vmatpush1.msra.mxu0 0.0
  %936 = vmatprep.subr.mxu0 0.0
  %937 = vmatpush1.msra.mxu0 0.0
  %938 = vmatprep.subr.mxu0 0.0
  %939 = vmatpush1.msra.mxu0 0.0
  %940 = vmatprep.subr.mxu0 0.0
  %941 = vmatpush1.msra.mxu0 0.0
  %942 = vmatprep.subr.mxu0 0.0
  %943 = vmatpush1.msra.mxu0 0.0
  %944 = vmatprep.subr.mxu0 0.0
  %945 = vmatpush1.msra.mxu0 0.0
  %946 = vmatprep.subr.mxu0 0.0
  %947 = vmatpush1.msra.mxu0 0.0
  %948 = vmatprep.subr.mxu0 0.0
  %949 = vmatpush1.msra.mxu0 0.0
  %950 = vmatprep.subr.mxu0 0.0
  %951 = vmatpush1.msra.mxu0 0.0
  %952 = vmatprep.subr.mxu0 0.0
  %953 = vmatpush1.msra.mxu0 0.0
  %954 = vmatprep.subr.mxu0 0.0
  %955 = vmatpush1.msra.mxu0 0.0
  %956 = vmatprep.subr.mxu0 0.0
  %957 = vmatpush1.msra.mxu0 0.0
  %958 = vmatprep.subr.mxu0 0.0
  %959 = vmatpush1.msra.mxu0 0.0
  %960 = vmatprep.subr.mxu0 0.0
  %961 = vmatpush1.msra.mxu0 0.0
  %962 = vmatprep.subr.mxu0 0.0
  %963 = vmatpush1.msra.mxu0 0.0
  %964 = vmatprep.mubr.f32.mxu0 0.0
  %965 = vmatmul.mubr.f32.gmra.mrb[0].mxu0 %v283
  %v966 = vpop.f32.mrb[0].mxu0
  %v967 = vadd.f32 %v893, %v966
  %v968 = vpop.f32.mrb[0].mxu0
  %969 = vmatprep.mubr.f32.mxu0 0.0
  %970 = vmatmul.mubr.f32.gmra.mrb[0].mxu0 %v383
  %v971 = vpop.f32.mrb[0].mxu0
  %v972 = vadd.f32 %v893, %v971
  %v973 = vpop.f32.mrb[0].mxu0
  %974 = vmatprep.mubr.f32.mxu0 0.0
  %975 = vmatmul.mubr.f32.gmra.mrb[0].mxu0 %v483
  %v976 = vpop.f32.mrb[0].mxu0
  %v977 = vadd.f32 %v893, %v976
  %v978 = vpop.f32.mrb[0].mxu0
  %979 = vmatprep.mubr.f32.mxu0 0.0
  %980 = vmatmul.mubr.f32.gmra.mrb[0].mxu0 %v583
  %v981 = vpop.f32.mrb[0].mxu0
  %v982 = vadd.f32 %v893, %v981
  %v983 = vpop.f32.mrb[0].mxu0
  %984 = vmatprep.mubr.f32.mxu0 0.0
  %985 = vmatmul.mubr.f32.gmra.mrb[0].mxu0 %v683
  %v986 = vpop.f32.mrb[0].mxu0
  %v987 = vadd.f32 %v893, %v986
  %v988 = vpop.f32.mrb[0].mxu0
  %989 = vmatprep.mubr.f32.mxu0 0.0
  %990 = vmatmul.mubr.f32.gmra.mrb[0].mxu0 %v783
  %v991 = vpop.f32.mrb[0].mxu0
  %v992 = vadd.f32 %v893, %v991
  %v993 = vpop.f32.mrb[0].mxu0
  %994 = vmatprep.mubr.f32.mxu0 0.0
  %995 = vmatmul.mubr.f32.gmra.mrb[0].mxu0 %v898
  %v996 = vpop.f32.mrb[0].mxu0
  %v997 = vadd.f32 %v893, %v996
  %v998 = vpop.f32.mrb[0].mxu0
  %999 = vdwg.mxu0
  %1000 = vmatprep.subr.mxu0 0.0
  %1001 = vmatpush1.msra.mxu0 %v884
  %1002 = vmatprep.subr.mxu0 0.0
  %1003 = vmatpush1.msra.mxu0 %v885
  %1004 = vmatprep.subr.mxu0 0.0
  %1005 = vmatpush1.msra.mxu0 %v886
  %1006 = vmatprep.subr.mxu0 0.0
  %1007 = vmatpush1.msra.mxu0 %v887
  %1008 = vmatprep.subr.mxu0 0.0
  %1009 = vmatpush1.msra.mxu0 0.0
  %1010 = vmatprep.subr.mxu0 0.0
  %1011 = vmatpush1.msra.mxu0 0.0
  %1012 = vmatprep.subr.mxu0 0.0
  %1013 = vmatpush1.msra.mxu0 0.0
  %1014 = vmatprep.subr.mxu0 0.0
  %1015 = vmatpush1.msra.mxu0 0.0
  %1016 = vmatprep.subr.mxu0 0.0
  %1017 = vmatpush1.msra.mxu0 0.0
  %1018 = vmatprep.subr.mxu0 0.0
  %1019 = vmatpush1.msra.mxu0 0.0
  %1020 = vmatprep.subr.mxu0 0.0
  %1021 = vmatpush1.msra.mxu0 0.0
  %1022 = vmatprep.subr.mxu0 0.0
  %1023 = vmatpush1.msra.mxu0 0.0
  %1024 = vmatprep.subr.mxu0 0.0
  %1025 = vmatpush1.msra.mxu0 0.0
  %1026 = vmatprep.subr.mxu0 0.0
  %1027 = vmatpush1.msra.mxu0 0.0
  %1028 = vmatprep.subr.mxu0 0.0
  %1029 = vmatpush1.msra.mxu0 0.0
  %1030 = vmatprep.subr.mxu0 0.0
  %1031 = vmatpush1.msra.mxu0 0.0
  %1032 = vmatprep.subr.mxu0 0.0
  %1033 = vmatpush1.msra.mxu0 0.0
  %1034 = vmatprep.subr.mxu0 0.0
  %1035 = vmatpush1.msra.mxu0 0.0
  %1036 = vmatprep.subr.mxu0 0.0
  %1037 = vmatpush1.msra.mxu0 0.0
  %1038 = vmatprep.subr.mxu0 0.0
  %1039 = vmatpush1.msra.mxu0 0.0
  %1040 = vmatprep.subr.mxu0 0.0
  %1041 = vmatpush1.msra.mxu0 0.0
  %1042 = vmatprep.subr.mxu0 0.0
  %1043 = vmatpush1.msra.mxu0 0.0
  %1044 = vmatprep.subr.mxu0 0.0
  %1045 = vmatpush1.msra.mxu0 0.0
  %1046 = vmatprep.subr.mxu0 0.0
  %1047 = vmatpush1.msra.mxu0 0.0
  %1048 = vmatprep.subr.mxu0 0.0
  %1049 = vmatpush1.msra.mxu0 0.0
  %1050 = vmatprep.subr.mxu0 0.0
  %1051 = vmatpush1.msra.mxu0 0.0
  %1052 = vmatprep.subr.mxu0 0.0
  %1053 = vmatpush1.msra.mxu0 0.0
  %1054 = vmatprep.subr.mxu0 0.0
  %1055 = vmatpush1.msra.mxu0 0.0
  %1056 = vmatprep.subr.mxu0 0.0
  %1057 = vmatpush1.msra.mxu0 0.0
  %1058 = vmatprep.subr.mxu0 0.0
  %1059 = vmatpush1.msra.mxu0 0.0
  %1060 = vmatprep.subr.mxu0 0.0
  %1061 = vmatpush1.msra.mxu0 0.0
  %1062 = vmatprep.subr.mxu0 0.0
  %1063 = vmatpush1.msra.mxu0 0.0
  %1064 = vmatprep.mubr.f32.mxu0 0.0
  %1065 = vmatmul.mubr.f32.gmra.mrb[0].mxu0 %v183
  %v1066 = vpop.f32.mrb[0].mxu0
  %v1067 = vadd.f32 0.0, %v1066
  %v1068 = vpop.f32.mrb[0].mxu0
  %1069 = vdwg.mxu0
  %v1070 = vadd.f32 %v967, %v1067
  %v1071 = vxor.u32 %v1070, 2147483648
  %v1072 = vmul.f32 %v1071, 1.442695
  %v1073 = vpow.pop %v1072
  %v1074 = vadd.f32 %v1073, 1.0
  %v1075 = vrcp.pop %v1074
  %v1076 = vmul.f32 1.0, %v1075
  %v1077 = vtanh.pop %v1070
  %v1078 = vmul.f32 %v1076, 0.0
  %1080 = vrot.lane.b32.xlu0 %v1077, 32
  %v1081 = vpop.permute.xlu0 %1080
  %v1083 = vmul.f32 %v1076, %v1081
  %1085 = vrot.lane.b32.xlu0 %v1083, 32
  %v1086 = vpop.permute.xlu0 %1085
  %v1088 = vadd.f32 %v1078, %v1086
  %v1089 = vtanh.pop %v1088
  %1091 = vrot.lane.b32.xlu0 %v1089, 32
  %v1092 = vpop.permute.xlu0 %1091
  %v1094 = vmul.f32 %v1076, %v1092
  %1096 = vrot.lane.b32.xlu0 %v1094, 64
  %v1097 = vpop.permute.xlu0 %1096
  %v1098 = vsel %vm181, %v1097, 0
  %1100 = vmatprep.subr.mxu0 0.0
  %1101 = vmatpush1.msra.mxu0 %v884
  %1102 = vmatprep.subr.mxu0 0.0
  %1103 = vmatpush1.msra.mxu0 %v885
  %1104 = vmatprep.subr.mxu0 0.0
  %1105 = vmatpush1.msra.mxu0 %v886
  %1106 = vmatprep.subr.mxu0 0.0
  %1107 = vmatpush1.msra.mxu0 %v887
  %1108 = vmatprep.subr.mxu0 0.0
  %1109 = vmatpush1.msra.mxu0 0.0
  %1110 = vmatprep.subr.mxu0 0.0
  %1111 = vmatpush1.msra.mxu0 0.0
  %1112 = vmatprep.subr.mxu0 0.0
  %1113 = vmatpush1.msra.mxu0 0.0
  %1114 = vmatprep.subr.mxu0 0.0
  %1115 = vmatpush1.msra.mxu0 0.0
  %1116 = vmatprep.subr.mxu0 0.0
  %1117 = vmatpush1.msra.mxu0 0.0
  %1118 = vmatprep.subr.mxu0 0.0
  %1119 = vmatpush1.msra.mxu0 0.0
  %1120 = vmatprep.subr.mxu0 0.0
  %1121 = vmatpush1.msra.mxu0 0.0
  %1122 = vmatprep.subr.mxu0 0.0
  %1123 = vmatpush1.msra.mxu0 0.0
  %1124 = vmatprep.subr.mxu0 0.0
  %1125 = vmatpush1.msra.mxu0 0.0
  %1126 = vmatprep.subr.mxu0 0.0
  %1127 = vmatpush1.msra.mxu0 0.0
  %1128 = vmatprep.subr.mxu0 0.0
  %1129 = vmatpush1.msra.mxu0 0.0
  %1130 = vmatprep.subr.mxu0 0.0
  %1131 = vmatpush1.msra.mxu0 0.0
  %1132 = vmatprep.subr.mxu0 0.0
  %1133 = vmatpush1.msra.mxu0 0.0
  %1134 = vmatprep.subr.mxu0 0.0
  %1135 = vmatpush1.msra.mxu0 0.0
  %1136 = vmatprep.subr.mxu0 0.0
  %1137 = vmatpush1.msra.mxu0 0.0
  %1138 = vmatprep.subr.mxu0 0.0
  %1139 = vmatpush1.msra.mxu0 0.0
  %1140 = vmatprep.subr.mxu0 0.0
  %1141 = vmatpush1.msra.mxu0 0.0
  %1142 = vmatprep.subr.mxu0 0.0
  %1143 = vmatpush1.msra.mxu0 0.0
  %1144 = vmatprep.subr.mxu0 0.0
  %1145 = vmatpush1.msra.mxu0 0.0
  %1146 = vmatprep.subr.mxu0 0.0
  %1147 = vmatpush1.msra.mxu0 0.0
  %1148 = vmatprep.subr.mxu0 0.0
  %1149 = vmatpush1.msra.mxu0 0.0
  %1150 = vmatprep.subr.mxu0 0.0
  %1151 = vmatpush1.msra.mxu0 0.0
  %1152 = vmatprep.subr.mxu0 0.0
  %1153 = vmatpush1.msra.mxu0 0.0
  %1154 = vmatprep.subr.mxu0 0.0
  %1155 = vmatpush1.msra.mxu0 0.0
  %1156 = vmatprep.subr.mxu0 0.0
  %1157 = vmatpush1.msra.mxu0 0.0
  %1158 = vmatprep.subr.mxu0 0.0
  %1159 = vmatpush1.msra.mxu0 0.0
  %1160 = vmatprep.subr.mxu0 0.0
  %1161 = vmatpush1.msra.mxu0 0.0
  %1162 = vmatprep.subr.mxu0 0.0
  %1163 = vmatpush1.msra.mxu0 0.0
  %1164 = vmatprep.mubr.f32.mxu0 0.0
  %1165 = vmatmul.mubr.f32.gmra.mrb[0].mxu0 %v1098
  %v1166 = vpop.f32.mrb[0].mxu0
  %v1167 = vadd.f32 0.0, %v1166
  %v1168 = vpop.f32.mrb[0].mxu0
  %1169 = vdwg.mxu0
  %v1170 = vadd.f32 %v972, %v1167
  %v1171 = vxor.u32 %v1170, 2147483648
  %v1172 = vmul.f32 %v1171, 1.442695
  %v1173 = vpow.pop %v1172
  %v1174 = vadd.f32 %v1173, 1.0
  %v1175 = vrcp.pop %v1174
  %v1176 = vmul.f32 1.0, %v1175
  %v1177 = vtanh.pop %v1170
  %v1178 = vmul.f32 %v1176, %v1088
  %1180 = vrot.lane.b32.xlu0 %v1177, 32
  %v1181 = vpop.permute.xlu0 %1180
  %v1183 = vmul.f32 %v1176, %v1181
  %1185 = vrot.lane.b32.xlu0 %v1183, 32
  %v1186 = vpop.permute.xlu0 %1185
  %v1188 = vadd.f32 %v1178, %v1186
  %v1189 = vtanh.pop %v1188
  %1191 = vrot.lane.b32.xlu0 %v1189, 32
  %v1192 = vpop.permute.xlu0 %1191
  %v1194 = vmul.f32 %v1176, %v1192
  %1196 = vrot.lane.b32.xlu0 %v1194, 64
  %v1197 = vpop.permute.xlu0 %1196
  %v1198 = vsel %vm181, %v1197, 0
  %1200 = vmatprep.subr.mxu0 0.0
  %1201 = vmatpush1.msra.mxu0 %v884
  %1202 = vmatprep.subr.mxu0 0.0
  %1203 = vmatpush1.msra.mxu0 %v885
  %1204 = vmatprep.subr.mxu0 0.0
  %1205 = vmatpush1.msra.mxu0 %v886
  %1206 = vmatprep.subr.mxu0 0.0
  %1207 = vmatpush1.msra.mxu0 %v887
  %1208 = vmatprep.subr.mxu0 0.0
  %1209 = vmatpush1.msra.mxu0 0.0
  %1210 = vmatprep.subr.mxu0 0.0
  %1211 = vmatpush1.msra.mxu0 0.0
  %1212 = vmatprep.subr.mxu0 0.0
  %1213 = vmatpush1.msra.mxu0 0.0
  %1214 = vmatprep.subr.mxu0 0.0
  %1215 = vmatpush1.msra.mxu0 0.0
  %1216 = vmatprep.subr.mxu0 0.0
  %1217 = vmatpush1.msra.mxu0 0.0
  %1218 = vmatprep.subr.mxu0 0.0
  %1219 = vmatpush1.msra.mxu0 0.0
  %1220 = vmatprep.subr.mxu0 0.0
  %1221 = vmatpush1.msra.mxu0 0.0
  %1222 = vmatprep.subr.mxu0 0.0
  %1223 = vmatpush1.msra.mxu0 0.0
  %1224 = vmatprep.subr.mxu0 0.0
  %1225 = vmatpush1.msra.mxu0 0.0
  %1226 = vmatprep.subr.mxu0 0.0
  %1227 = vmatpush1.msra.mxu0 0.0
  %1228 = vmatprep.subr.mxu0 0.0
  %1229 = vmatpush1.msra.mxu0 0.0
  %1230 = vmatprep.subr.mxu0 0.0
  %1231 = vmatpush1.msra.mxu0 0.0
  %1232 = vmatprep.subr.mxu0 0.0
  %1233 = vmatpush1.msra.mxu0 0.0
  %1234 = vmatprep.subr.mxu0 0.0
  %1235 = vmatpush1.msra.mxu0 0.0
  %1236 = vmatprep.subr.mxu0 0.0
  %1237 = vmatpush1.msra.mxu0 0.0
  %1238 = vmatprep.subr.mxu0 0.0
  %1239 = vmatpush1.msra.mxu0 0.0
  %1240 = vmatprep.subr.mxu0 0.0
  %1241 = vmatpush1.msra.mxu0 0.0
  %1242 = vmatprep.subr.mxu0 0.0
  %1243 = vmatpush1.msra.mxu0 0.0
  %1244 = vmatprep.subr.mxu0 0.0
  %1245 = vmatpush1.msra.mxu0 0.0
  %1246 = vmatprep.subr.mxu0 0.0
  %1247 = vmatpush1.msra.mxu0 0.0
  %1248 = vmatprep.subr.mxu0 0.0
  %1249 = vmatpush1.msra.mxu0 0.0
  %1250 = vmatprep.subr.mxu0 0.0
  %1251 = vmatpush1.msra.mxu0 0.0
  %1252 = vmatprep.subr.mxu0 0.0
  %1253 = vmatpush1.msra.mxu0 0.0
  %1254 = vmatprep.subr.mxu0 0.0
  %1255 = vmatpush1.msra.mxu0 0.0
  %1256 = vmatprep.subr.mxu0 0.0
  %1257 = vmatpush1.msra.mxu0 0.0
  %1258 = vmatprep.subr.mxu0 0.0
  %1259 = vmatpush1.msra.mxu0 0.0
  %1260 = vmatprep.subr.mxu0 0.0
  %1261 = vmatpush1.msra.mxu0 0.0
  %1262 = vmatprep.subr.mxu0 0.0
  %1263 = vmatpush1.msra.mxu0 0.0
  %1264 = vmatprep.mubr.f32.mxu0 0.0
  %1265 = vmatmul.mubr.f32.gmra.mrb[0].mxu0 %v1198
  %v1266 = vpop.f32.mrb[0].mxu0
  %v1267 = vadd.f32 0.0, %v1266
  %v1268 = vpop.f32.mrb[0].mxu0
  %1269 = vdwg.mxu0
  %v1270 = vadd.f32 %v977, %v1267
  %v1271 = vxor.u32 %v1270, 2147483648
  %v1272 = vmul.f32 %v1271, 1.442695
  %v1273 = vpow.pop %v1272
  %v1274 = vadd.f32 %v1273, 1.0
  %v1275 = vrcp.pop %v1274
  %v1276 = vmul.f32 1.0, %v1275
  %v1277 = vtanh.pop %v1270
  %v1278 = vmul.f32 %v1276, %v1188
  %1280 = vrot.lane.b32.xlu0 %v1277, 32
  %v1281 = vpop.permute.xlu0 %1280
  %v1283 = vmul.f32 %v1276, %v1281
  %1285 = vrot.lane.b32.xlu0 %v1283, 32
  %v1286 = vpop.permute.xlu0 %1285
  %v1288 = vadd.f32 %v1278, %v1286
  %v1289 = vtanh.pop %v1288
  %1291 = vrot.lane.b32.xlu0 %v1289, 32
  %v1292 = vpop.permute.xlu0 %1291
  %v1294 = vmul.f32 %v1276, %v1292
  %1296 = vrot.lane.b32.xlu0 %v1294, 64
  %v1297 = vpop.permute.xlu0 %1296
  %v1298 = vsel %vm181, %v1297, 0
  %1300 = vmatprep.subr.mxu0 0.0
  %1301 = vmatpush1.msra.mxu0 %v884
  %1302 = vmatprep.subr.mxu0 0.0
  %1303 = vmatpush1.msra.mxu0 %v885
  %1304 = vmatprep.subr.mxu0 0.0
  %1305 = vmatpush1.msra.mxu0 %v886
  %1306 = vmatprep.subr.mxu0 0.0
  %1307 = vmatpush1.msra.mxu0 %v887
  %1308 = vmatprep.subr.mxu0 0.0
  %1309 = vmatpush1.msra.mxu0 0.0
  %1310 = vmatprep.subr.mxu0 0.0
  %1311 = vmatpush1.msra.mxu0 0.0
  %1312 = vmatprep.subr.mxu0 0.0
  %1313 = vmatpush1.msra.mxu0 0.0
  %1314 = vmatprep.subr.mxu0 0.0
  %1315 = vmatpush1.msra.mxu0 0.0
  %1316 = vmatprep.subr.mxu0 0.0
  %1317 = vmatpush1.msra.mxu0 0.0
  %1318 = vmatprep.subr.mxu0 0.0
  %1319 = vmatpush1.msra.mxu0 0.0
  %1320 = vmatprep.subr.mxu0 0.0
  %1321 = vmatpush1.msra.mxu0 0.0
  %1322 = vmatprep.subr.mxu0 0.0
  %1323 = vmatpush1.msra.mxu0 0.0
  %1324 = vmatprep.subr.mxu0 0.0
  %1325 = vmatpush1.msra.mxu0 0.0
  %1326 = vmatprep.subr.mxu0 0.0
  %1327 = vmatpush1.msra.mxu0 0.0
  %1328 = vmatprep.subr.mxu0 0.0
  %1329 = vmatpush1.msra.mxu0 0.0
  %1330 = vmatprep.subr.mxu0 0.0
  %1331 = vmatpush1.msra.mxu0 0.0
  %1332 = vmatprep.subr.mxu0 0.0
  %1333 = vmatpush1.msra.mxu0 0.0
  %1334 = vmatprep.subr.mxu0 0.0
  %1335 = vmatpush1.msra.mxu0 0.0
  %1336 = vmatprep.subr.mxu0 0.0
  %1337 = vmatpush1.msra.mxu0 0.0
  %1338 = vmatprep.subr.mxu0 0.0
  %1339 = vmatpush1.msra.mxu0 0.0
  %1340 = vmatprep.subr.mxu0 0.0
  %1341 = vmatpush1.msra.mxu0 0.0
  %1342 = vmatprep.subr.mxu0 0.0
  %1343 = vmatpush1.msra.mxu0 0.0
  %1344 = vmatprep.subr.mxu0 0.0
  %1345 = vmatpush1.msra.mxu0 0.0
  %1346 = vmatprep.subr.mxu0 0.0
  %1347 = vmatpush1.msra.mxu0 0.0
  %1348 = vmatprep.subr.mxu0 0.0
  %1349 = vmatpush1.msra.mxu0 0.0
  %1350 = vmatprep.subr.mxu0 0.0
  %1351 = vmatpush1.msra.mxu0 0.0
  %1352 = vmatprep.subr.mxu0 0.0
  %1353 = vmatpush1.msra.mxu0 0.0
  %1354 = vmatprep.subr.mxu0 0.0
  %1355 = vmatpush1.msra.mxu0 0.0
  %1356 = vmatprep.subr.mxu0 0.0
  %1357 = vmatpush1.msra.mxu0 0.0
  %1358 = vmatprep.subr.mxu0 0.0
  %1359 = vmatpush1.msra.mxu0 0.0
  %1360 = vmatprep.subr.mxu0 0.0
  %1361 = vmatpush1.msra.mxu0 0.0
  %1362 = vmatprep.subr.mxu0 0.0
  %1363 = vmatpush1.msra.mxu0 0.0
  %1364 = vmatprep.mubr.f32.mxu0 0.0
  %1365 = vmatmul.mubr.f32.gmra.mrb[0].mxu0 %v1298
  %v1366 = vpop.f32.mrb[0].mxu0
  %v1367 = vadd.f32 0.0, %v1366
  %v1368 = vpop.f32.mrb[0].mxu0
  %1369 = vdwg.mxu0
  %v1370 = vadd.f32 %v982, %v1367
  %v1371 = vxor.u32 %v1370, 2147483648
  %v1372 = vmul.f32 %v1371, 1.442695
  %v1373 = vpow.pop %v1372
  %v1374 = vadd.f32 %v1373, 1.0
  %v1375 = vrcp.pop %v1374
  %v1376 = vmul.f32 1.0, %v1375
  %v1377 = vtanh.pop %v1370
  %v1378 = vmul.f32 %v1376, %v1288
  %1380 = vrot.lane.b32.xlu0 %v1377, 32
  %v1381 = vpop.permute.xlu0 %1380
  %v1383 = vmul.f32 %v1376, %v1381
  %1385 = vrot.lane.b32.xlu0 %v1383, 32
  %v1386 = vpop.permute.xlu0 %1385
  %v1388 = vadd.f32 %v1378, %v1386
  %v1389 = vtanh.pop %v1388
  %1391 = vrot.lane.b32.xlu0 %v1389, 32
  %v1392 = vpop.permute.xlu0 %1391
  %v1394 = vmul.f32 %v1376, %v1392
  %1396 = vrot.lane.b32.xlu0 %v1394, 64
  %v1397 = vpop.permute.xlu0 %1396
  %v1398 = vsel %vm181, %v1397, 0
  %1400 = vmatprep.subr.mxu0 0.0
  %1401 = vmatpush1.msra.mxu0 %v884
  %1402 = vmatprep.subr.mxu0 0.0
  %1403 = vmatpush1.msra.mxu0 %v885
  %1404 = vmatprep.subr.mxu0 0.0
  %1405 = vmatpush1.msra.mxu0 %v886
  %1406 = vmatprep.subr.mxu0 0.0
  %1407 = vmatpush1.msra.mxu0 %v887
  %1408 = vmatprep.subr.mxu0 0.0
  %1409 = vmatpush1.msra.mxu0 0.0
  %1410 = vmatprep.subr.mxu0 0.0
  %1411 = vmatpush1.msra.mxu0 0.0
  %1412 = vmatprep.subr.mxu0 0.0
  %1413 = vmatpush1.msra.mxu0 0.0
  %1414 = vmatprep.subr.mxu0 0.0
  %1415 = vmatpush1.msra.mxu0 0.0
  %1416 = vmatprep.subr.mxu0 0.0
  %1417 = vmatpush1.msra.mxu0 0.0
  %1418 = vmatprep.subr.mxu0 0.0
  %1419 = vmatpush1.msra.mxu0 0.0
  %1420 = vmatprep.subr.mxu0 0.0
  %1421 = vmatpush1.msra.mxu0 0.0
  %1422 = vmatprep.subr.mxu0 0.0
  %1423 = vmatpush1.msra.mxu0 0.0
  %1424 = vmatprep.subr.mxu0 0.0
  %1425 = vmatpush1.msra.mxu0 0.0
  %1426 = vmatprep.subr.mxu0 0.0
  %1427 = vmatpush1.msra.mxu0 0.0
  %1428 = vmatprep.subr.mxu0 0.0
  %1429 = vmatpush1.msra.mxu0 0.0
  %1430 = vmatprep.subr.mxu0 0.0
  %1431 = vmatpush1.msra.mxu0 0.0
  %1432 = vmatprep.subr.mxu0 0.0
  %1433 = vmatpush1.msra.mxu0 0.0
  %1434 = vmatprep.subr.mxu0 0.0
  %1435 = vmatpush1.msra.mxu0 0.0
  %1436 = vmatprep.subr.mxu0 0.0
  %1437 = vmatpush1.msra.mxu0 0.0
  %1438 = vmatprep.subr.mxu0 0.0
  %1439 = vmatpush1.msra.mxu0 0.0
  %1440 = vmatprep.subr.mxu0 0.0
  %1441 = vmatpush1.msra.mxu0 0.0
  %1442 = vmatprep.subr.mxu0 0.0
  %1443 = vmatpush1.msra.mxu0 0.0
  %1444 = vmatprep.subr.mxu0 0.0
  %1445 = vmatpush1.msra.mxu0 0.0
  %1446 = vmatprep.subr.mxu0 0.0
  %1447 = vmatpush1.msra.mxu0 0.0
  %1448 = vmatprep.subr.mxu0 0.0
  %1449 = vmatpush1.msra.mxu0 0.0
  %1450 = vmatprep.subr.mxu0 0.0
  %1451 = vmatpush1.msra.mxu0 0.0
  %1452 = vmatprep.subr.mxu0 0.0
  %1453 = vmatpush1.msra.mxu0 0.0
  %1454 = vmatprep.subr.mxu0 0.0
  %1455 = vmatpush1.msra.mxu0 0.0
  %1456 = vmatprep.subr.mxu0 0.0
  %1457 = vmatpush1.msra.mxu0 0.0
  %1458 = vmatprep.subr.mxu0 0.0
  %1459 = vmatpush1.msra.mxu0 0.0
  %1460 = vmatprep.subr.mxu0 0.0
  %1461 = vmatpush1.msra.mxu0 0.0
  %1462 = vmatprep.subr.mxu0 0.0
  %1463 = vmatpush1.msra.mxu0 0.0
  %1464 = vmatprep.mubr.f32.mxu0 0.0
  %1465 = vmatmul.mubr.f32.gmra.mrb[0].mxu0 %v1398
  %v1466 = vpop.f32.mrb[0].mxu0
  %v1467 = vadd.f32 0.0, %v1466
  %v1468 = vpop.f32.mrb[0].mxu0
  %1469 = vdwg.mxu0
  %v1470 = vadd.f32 %v987, %v1467
  %v1471 = vxor.u32 %v1470, 2147483648
  %v1472 = vmul.f32 %v1471, 1.442695
  %v1473 = vpow.pop %v1472
  %v1474 = vadd.f32 %v1473, 1.0
  %v1475 = vrcp.pop %v1474
  %v1476 = vmul.f32 1.0, %v1475
  %v1477 = vtanh.pop %v1470
  %v1478 = vmul.f32 %v1476, %v1388
  %1480 = vrot.lane.b32.xlu0 %v1477, 32
  %v1481 = vpop.permute.xlu0 %1480
  %v1483 = vmul.f32 %v1476, %v1481
  %1485 = vrot.lane.b32.xlu0 %v1483, 32
  %v1486 = vpop.permute.xlu0 %1485
  %v1488 = vadd.f32 %v1478, %v1486
  %v1489 = vtanh.pop %v1488
  %1491 = vrot.lane.b32.xlu0 %v1489, 32
  %v1492 = vpop.permute.xlu0 %1491
  %v1494 = vmul.f32 %v1476, %v1492
  %1496 = vrot.lane.b32.xlu0 %v1494, 64
  %v1497 = vpop.permute.xlu0 %1496
  %v1498 = vsel %vm181, %v1497, 0
  %1500 = vmatprep.subr.mxu0 0.0
  %1501 = vmatpush1.msra.mxu0 %v884
  %1502 = vmatprep.subr.mxu0 0.0
  %1503 = vmatpush1.msra.mxu0 %v885
  %1504 = vmatprep.subr.mxu0 0.0
  %1505 = vmatpush1.msra.mxu0 %v886
  %1506 = vmatprep.subr.mxu0 0.0
  %1507 = vmatpush1.msra.mxu0 %v887
  %1508 = vmatprep.subr.mxu0 0.0
  %1509 = vmatpush1.msra.mxu0 0.0
  %1510 = vmatprep.subr.mxu0 0.0
  %1511 = vmatpush1.msra.mxu0 0.0
  %1512 = vmatprep.subr.mxu0 0.0
  %1513 = vmatpush1.msra.mxu0 0.0
  %1514 = vmatprep.subr.mxu0 0.0
  %1515 = vmatpush1.msra.mxu0 0.0
  %1516 = vmatprep.subr.mxu0 0.0
  %1517 = vmatpush1.msra.mxu0 0.0
  %1518 = vmatprep.subr.mxu0 0.0
  %1519 = vmatpush1.msra.mxu0 0.0
  %1520 = vmatprep.subr.mxu0 0.0
  %1521 = vmatpush1.msra.mxu0 0.0
  %1522 = vmatprep.subr.mxu0 0.0
  %1523 = vmatpush1.msra.mxu0 0.0
  %1524 = vmatprep.subr.mxu0 0.0
  %1525 = vmatpush1.msra.mxu0 0.0
  %1526 = vmatprep.subr.mxu0 0.0
  %1527 = vmatpush1.msra.mxu0 0.0
  %1528 = vmatprep.subr.mxu0 0.0
  %1529 = vmatpush1.msra.mxu0 0.0
  %1530 = vmatprep.subr.mxu0 0.0
  %1531 = vmatpush1.msra.mxu0 0.0
  %1532 = vmatprep.subr.mxu0 0.0
  %1533 = vmatpush1.msra.mxu0 0.0
  %1534 = vmatprep.subr.mxu0 0.0
  %1535 = vmatpush1.msra.mxu0 0.0
  %1536 = vmatprep.subr.mxu0 0.0
  %1537 = vmatpush1.msra.mxu0 0.0
  %1538 = vmatprep.subr.mxu0 0.0
  %1539 = vmatpush1.msra.mxu0 0.0
  %1540 = vmatprep.subr.mxu0 0.0
  %1541 = vmatpush1.msra.mxu0 0.0
  %1542 = vmatprep.subr.mxu0 0.0
  %1543 = vmatpush1.msra.mxu0 0.0
  %1544 = vmatprep.subr.mxu0 0.0
  %1545 = vmatpush1.msra.mxu0 0.0
  %1546 = vmatprep.subr.mxu0 0.0
  %1547 = vmatpush1.msra.mxu0 0.0
  %1548 = vmatprep.subr.mxu0 0.0
  %1549 = vmatpush1.msra.mxu0 0.0
  %1550 = vmatprep.subr.mxu0 0.0
  %1551 = vmatpush1.msra.mxu0 0.0
  %1552 = vmatprep.subr.mxu0 0.0
  %1553 = vmatpush1.msra.mxu0 0.0
  %1554 = vmatprep.subr.mxu0 0.0
  %1555 = vmatpush1.msra.mxu0 0.0
  %1556 = vmatprep.subr.mxu0 0.0
  %1557 = vmatpush1.msra.mxu0 0.0
  %1558 = vmatprep.subr.mxu0 0.0
  %1559 = vmatpush1.msra.mxu0 0.0
  %1560 = vmatprep.subr.mxu0 0.0
  %1561 = vmatpush1.msra.mxu0 0.0
  %1562 = vmatprep.subr.mxu0 0.0
  %1563 = vmatpush1.msra.mxu0 0.0
  %1564 = vmatprep.mubr.f32.mxu0 0.0
  %1565 = vmatmul.mubr.f32.gmra.mrb[0].mxu0 %v1498
  %v1566 = vpop.f32.mrb[0].mxu0
  %v1567 = vadd.f32 0.0, %v1566
  %v1568 = vpop.f32.mrb[0].mxu0
  %1569 = vdwg.mxu0
  %v1570 = vadd.f32 %v992, %v1567
  %v1571 = vxor.u32 %v1570, 2147483648
  %v1572 = vmul.f32 %v1571, 1.442695
  %v1573 = vpow.pop %v1572
  %v1574 = vadd.f32 %v1573, 1.0
  %v1575 = vrcp.pop %v1574
  %v1576 = vmul.f32 1.0, %v1575
  %v1577 = vtanh.pop %v1570
  %v1578 = vmul.f32 %v1576, %v1488
  %1580 = vrot.lane.b32.xlu0 %v1577, 32
  %v1581 = vpop.permute.xlu0 %1580
  %v1583 = vmul.f32 %v1576, %v1581
  %1585 = vrot.lane.b32.xlu0 %v1583, 32
  %v1586 = vpop.permute.xlu0 %1585
  %v1588 = vadd.f32 %v1578, %v1586
  %v1589 = vtanh.pop %v1588
  %1591 = vrot.lane.b32.xlu0 %v1589, 32
  %v1592 = vpop.permute.xlu0 %1591
  %v1594 = vmul.f32 %v1576, %v1592
  %1596 = vrot.lane.b32.xlu0 %v1594, 64
  %v1597 = vpop.permute.xlu0 %1596
  %v1598 = vsel %vm181, %v1597, 0
  %1600 = vmatprep.subr.mxu0 0.0
  %1601 = vmatpush1.msra.mxu0 %v884
  %1602 = vmatprep.subr.mxu0 0.0
  %1603 = vmatpush1.msra.mxu0 %v885
  %1604 = vmatprep.subr.mxu0 0.0
  %1605 = vmatpush1.msra.mxu0 %v886
  %1606 = vmatprep.subr.mxu0 0.0
  %1607 = vmatpush1.msra.mxu0 %v887
  %1608 = vmatprep.subr.mxu0 0.0
  %1609 = vmatpush1.msra.mxu0 0.0
  %1610 = vmatprep.subr.mxu0 0.0
  %1611 = vmatpush1.msra.mxu0 0.0
  %1612 = vmatprep.subr.mxu0 0.0
  %1613 = vmatpush1.msra.mxu0 0.0
  %1614 = vmatprep.subr.mxu0 0.0
  %1615 = vmatpush1.msra.mxu0 0.0
  %1616 = vmatprep.subr.mxu0 0.0
  %1617 = vmatpush1.msra.mxu0 0.0
  %1618 = vmatprep.subr.mxu0 0.0
  %1619 = vmatpush1.msra.mxu0 0.0
  %1620 = vmatprep.subr.mxu0 0.0
  %1621 = vmatpush1.msra.mxu0 0.0
  %1622 = vmatprep.subr.mxu0 0.0
  %1623 = vmatpush1.msra.mxu0 0.0
  %1624 = vmatprep.subr.mxu0 0.0
  %1625 = vmatpush1.msra.mxu0 0.0
  %1626 = vmatprep.subr.mxu0 0.0
  %1627 = vmatpush1.msra.mxu0 0.0
  %1628 = vmatprep.subr.mxu0 0.0
  %1629 = vmatpush1.msra.mxu0 0.0
  %1630 = vmatprep.subr.mxu0 0.0
  %1631 = vmatpush1.msra.mxu0 0.0
  %1632 = vmatprep.subr.mxu0 0.0
  %1633 = vmatpush1.msra.mxu0 0.0
  %1634 = vmatprep.subr.mxu0 0.0
  %1635 = vmatpush1.msra.mxu0 0.0
  %1636 = vmatprep.subr.mxu0 0.0
  %1637 = vmatpush1.msra.mxu0 0.0
  %1638 = vmatprep.subr.mxu0 0.0
  %1639 = vmatpush1.msra.mxu0 0.0
  %1640 = vmatprep.subr.mxu0 0.0
  %1641 = vmatpush1.msra.mxu0 0.0
  %1642 = vmatprep.subr.mxu0 0.0
  %1643 = vmatpush1.msra.mxu0 0.0
  %1644 = vmatprep.subr.mxu0 0.0
  %1645 = vmatpush1.msra.mxu0 0.0
  %1646 = vmatprep.subr.mxu0 0.0
  %1647 = vmatpush1.msra.mxu0 0.0
  %1648 = vmatprep.subr.mxu0 0.0
  %1649 = vmatpush1.msra.mxu0 0.0
  %1650 = vmatprep.subr.mxu0 0.0
  %1651 = vmatpush1.msra.mxu0 0.0
  %1652 = vmatprep.subr.mxu0 0.0
  %1653 = vmatpush1.msra.mxu0 0.0
  %1654 = vmatprep.subr.mxu0 0.0
  %1655 = vmatpush1.msra.mxu0 0.0
  %1656 = vmatprep.subr.mxu0 0.0
  %1657 = vmatpush1.msra.mxu0 0.0
  %1658 = vmatprep.subr.mxu0 0.0
  %1659 = vmatpush1.msra.mxu0 0.0
  %1660 = vmatprep.subr.mxu0 0.0
  %1661 = vmatpush1.msra.mxu0 0.0
  %1662 = vmatprep.subr.mxu0 0.0
  %1663 = vmatpush1.msra.mxu0 0.0
  %1664 = vmatprep.mubr.f32.mxu0 0.0
  %1665 = vmatmul.mubr.f32.gmra.mrb[0].mxu0 %v1598
  %v1666 = vpop.f32.mrb[0].mxu0
  %v1667 = vadd.f32 0.0, %v1666
  %v1668 = vpop.f32.mrb[0].mxu0
  %1669 = vdwg.mxu0
  %v1670 = vadd.f32 %v997, %v1667
  %v1671 = vxor.u32 %v1670, 2147483648
  %v1672 = vmul.f32 %v1671, 1.442695
  %v1673 = vpow.pop %v1672
  %v1674 = vadd.f32 %v1673, 1.0
  %v1675 = vrcp.pop %v1674
  %v1676 = vmul.f32 1.0, %v1675
  %v1677 = vtanh.pop %v1670
  %v1678 = vmul.f32 %v1676, %v1588
  %1680 = vrot.lane.b32.xlu0 %v1677, 32
  %v1681 = vpop.permute.xlu0 %1680
  %v1683 = vmul.f32 %v1676, %v1681
  %1685 = vrot.lane.b32.xlu0 %v1683, 32
  %v1686 = vpop.permute.xlu0 %1685
  %v1688 = vadd.f32 %v1678, %v1686
  %v1689 = vtanh.pop %v1688
  %1691 = vrot.lane.b32.xlu0 %v1689, 32
  %v1692 = vpop.permute.xlu0 %1691
  %v1694 = vmul.f32 %v1676, %v1692
  %v1695 = vld [vmem:[%s2] sm:$0xff]
  %v1696 = vld [vmem:[%s2 + $0x8] sm:$0xff]
  %v1697 = vld [vmem:[%s2 + $0x10] sm:$0xff]
  %v1698 = vld [vmem:[%s2 + $0x18] sm:$0xff]
  %v1699 = vld [vmem:[%s1] sm:$0xff]
  %v1700 = vld [vmem:[%s3] sm:$0x3]
  %vm1701 = vcmask 15360
  %v1703 = vsel %vm1701, %v1699, 0
  %vm1705 = vcmask 1041408
  %v1707 = vsel %vm1705, %v1700, 0
  %1709 = vmatprep.subr.mxu0 0.0
  %1710 = vmatpush1.msra.mxu0 %v1707
  %1711 = vmatprep.subr.mxu0 0.0
  %1712 = vmatpush1.msra.mxu0 0.0
  %1713 = vmatprep.subr.mxu0 0.0
  %1714 = vmatpush1.msra.mxu0 0.0
  %1715 = vmatprep.subr.mxu0 0.0
  %1716 = vmatpush1.msra.mxu0 0.0
  %1717 = vmatprep.subr.mxu0 0.0
  %1718 = vmatpush1.msra.mxu0 0.0
  %1719 = vmatprep.subr.mxu0 0.0
  %1720 = vmatpush1.msra.mxu0 0.0
  %1721 = vmatprep.subr.mxu0 0.0
  %1722 = vmatpush1.msra.mxu0 0.0
  %1723 = vmatprep.subr.mxu0 0.0
  %1724 = vmatpush1.msra.mxu0 0.0
  %1725 = vmatprep.subr.mxu0 0.0
  %1726 = vmatpush1.msra.mxu0 0.0
  %1727 = vmatprep.subr.mxu0 0.0
  %1728 = vmatpush1.msra.mxu0 0.0
  %1729 = vmatprep.subr.mxu0 0.0
  %1730 = vmatpush1.msra.mxu0 0.0
  %1731 = vmatprep.subr.mxu0 0.0
  %1732 = vmatpush1.msra.mxu0 0.0
  %1733 = vmatprep.subr.mxu0 0.0
  %1734 = vmatpush1.msra.mxu0 0.0
  %1735 = vmatprep.subr.mxu0 0.0
  %1736 = vmatpush1.msra.mxu0 0.0
  %1737 = vmatprep.subr.mxu0 0.0
  %1738 = vmatpush1.msra.mxu0 0.0
  %1739 = vmatprep.subr.mxu0 0.0
  %1740 = vmatpush1.msra.mxu0 0.0
  %1741 = vmatprep.subr.mxu0 0.0
  %1742 = vmatpush1.msra.mxu0 0.0
  %1743 = vmatprep.subr.mxu0 0.0
  %1744 = vmatpush1.msra.mxu0 0.0
  %1745 = vmatprep.subr.mxu0 0.0
  %1746 = vmatpush1.msra.mxu0 0.0
  %1747 = vmatprep.subr.mxu0 0.0
  %1748 = vmatpush1.msra.mxu0 0.0
  %1749 = vmatprep.subr.mxu0 0.0
  %1750 = vmatpush1.msra.mxu0 0.0
  %1751 = vmatprep.subr.mxu0 0.0
  %1752 = vmatpush1.msra.mxu0 0.0
  %1753 = vmatprep.subr.mxu0 0.0
  %1754 = vmatpush1.msra.mxu0 0.0
  %1755 = vmatprep.subr.mxu0 0.0
  %1756 = vmatpush1.msra.mxu0 0.0
  %1757 = vmatprep.subr.mxu0 0.0
  %1758 = vmatpush1.msra.mxu0 0.0
  %1759 = vmatprep.subr.mxu0 0.0
  %1760 = vmatpush1.msra.mxu0 0.0
  %1761 = vmatprep.subr.mxu0 0.0
  %1762 = vmatpush1.msra.mxu0 0.0
  %1763 = vmatprep.subr.mxu0 0.0
  %1764 = vmatpush1.msra.mxu0 0.0
  %1765 = vmatprep.subr.mxu0 0.0
  %1766 = vmatpush1.msra.mxu0 0.0
  %1767 = vmatprep.subr.mxu0 0.0
  %1768 = vmatpush1.msra.mxu0 0.0
  %1769 = vmatprep.subr.mxu0 0.0
  %1770 = vmatpush1.msra.mxu0 0.0
  %1771 = vmatprep.subr.mxu0 0.0
  %1772 = vmatpush1.msra.mxu0 0.0
  %1773 = vmatprep.mubr.f32.mxu0 0.0
  %1774 = vmatmul.mubr.f32.gmra.mrb[0].mxu0 %v1703
  %v1775 = vpop.f32.mrb[0].mxu0
  %v1776 = vadd.f32 0.0, %v1775
  %v1777 = vpop.f32.mrb[0].mxu0
  %1778 = vdwg.mxu0
  %1780 = vrot.lane.b32.xlu0 %v1694, 64
  %v1781 = vpop.permute.xlu0 %1780
  %v1782 = vsel %vm181, %v1781, 0
  %1784 = vmatprep.subr.mxu0 0.0
  %1785 = vmatpush1.msra.mxu0 %v1695
  %1786 = vmatprep.subr.mxu0 0.0
  %1787 = vmatpush1.msra.mxu0 %v1696
  %1788 = vmatprep.subr.mxu0 0.0
  %1789 = vmatpush1.msra.mxu0 %v1697
  %1790 = vmatprep.subr.mxu0 0.0
  %1791 = vmatpush1.msra.mxu0 %v1698
  %1792 = vmatprep.subr.mxu0 0.0
  %1793 = vmatpush1.msra.mxu0 0.0
  %1794 = vmatprep.subr.mxu0 0.0
  %1795 = vmatpush1.msra.mxu0 0.0
  %1796 = vmatprep.subr.mxu0 0.0
  %1797 = vmatpush1.msra.mxu0 0.0
  %1798 = vmatprep.subr.mxu0 0.0
  %1799 = vmatpush1.msra.mxu0 0.0
  %1800 = vmatprep.subr.mxu0 0.0
  %1801 = vmatpush1.msra.mxu0 0.0
  %1802 = vmatprep.subr.mxu0 0.0
  %1803 = vmatpush1.msra.mxu0 0.0
  %1804 = vmatprep.subr.mxu0 0.0
  %1805 = vmatpush1.msra.mxu0 0.0
  %1806 = vmatprep.subr.mxu0 0.0
  %1807 = vmatpush1.msra.mxu0 0.0
  %1808 = vmatprep.subr.mxu0 0.0
  %1809 = vmatpush1.msra.mxu0 0.0
  %1810 = vmatprep.subr.mxu0 0.0
  %1811 = vmatpush1.msra.mxu0 0.0
  %1812 = vmatprep.subr.mxu0 0.0
  %1813 = vmatpush1.msra.mxu0 0.0
  %1814 = vmatprep.subr.mxu0 0.0
  %1815 = vmatpush1.msra.mxu0 0.0
  %1816 = vmatprep.subr.mxu0 0.0
  %1817 = vmatpush1.msra.mxu0 0.0
  %1818 = vmatprep.subr.mxu0 0.0
  %1819 = vmatpush1.msra.mxu0 0.0
  %1820 = vmatprep.subr.mxu0 0.0
  %1821 = vmatpush1.msra.mxu0 0.0
  %1822 = vmatprep.subr.mxu0 0.0
  %1823 = vmatpush1.msra.mxu0 0.0
  %1824 = vmatprep.subr.mxu0 0.0
  %1825 = vmatpush1.msra.mxu0 0.0
  %1826 = vmatprep.subr.mxu0 0.0
  %1827 = vmatpush1.msra.mxu0 0.0
  %1828 = vmatprep.subr.mxu0 0.0
  %1829 = vmatpush1.msra.mxu0 0.0
  %1830 = vmatprep.subr.mxu0 0.0
  %1831 = vmatpush1.msra.mxu0 0.0
  %1832 = vmatprep.subr.mxu0 0.0
  %1833 = vmatpush1.msra.mxu0 0.0
  %1834 = vmatprep.subr.mxu0 0.0
  %1835 = vmatpush1.msra.mxu0 0.0
  %1836 = vmatprep.subr.mxu0 0.0
  %1837 = vmatpush1.msra.mxu0 0.0
  %1838 = vmatprep.subr.mxu0 0.0
  %1839 = vmatpush1.msra.mxu0 0.0
  %1840 = vmatprep.subr.mxu0 0.0
  %1841 = vmatpush1.msra.mxu0 0.0
  %1842 = vmatprep.subr.mxu0 0.0
  %1843 = vmatpush1.msra.mxu0 0.0
  %1844 = vmatprep.subr.mxu0 0.0
  %1845 = vmatpush1.msra.mxu0 0.0
  %1846 = vmatprep.subr.mxu0 0.0
  %1847 = vmatpush1.msra.mxu0 0.0
  %1848 = vmatprep.mubr.f32.mxu0 0.0
  %1849 = vmatmul.mubr.f32.gmra.mrb[0].mxu0 %v1782
  %v1850 = vpop.f32.mrb[0].mxu0
  %v1851 = vadd.f32 %v1776, %v1850
  %v1852 = vpop.f32.mrb[0].mxu0
  %1853 = vdwg.mxu0
  %v1854 = vld [vmem:[#allocation2] sm:$0x1]
  %v1856 = vlaneseq
  %v1857 = vshrl.u32 %v1856, 7
  %v1858 = vsub.s32 0, %v1857
  %v1859 = vrot.slane %v1854, %v1858
  %v1861 = vadd.f32 %v1851, %v1859
  %vm1862 = vcmask 7168
  %1863 = vst.msk [vmem:[%s11] sm:$0xff] %vm1862, %v1861
  // Predicated region
  $region46: #{tpu_custom_call.1} parent=0 // pred_check
    _
  $region47: #{tpu_custom_call.1} parent=0 // pred_check_branch
    %1865 = sbr.rel (0) target = $region49
  $region48: #{tpu_custom_call.1} parent=0 // pred_region
    _
  $region49: #{tpu_custom_call.1} parent=0 // pred_fallthru
    _
  // Predicated region
  $region50: #{tpu_custom_call.1} parent=0 // pred_check
    _
  $region51: #{tpu_custom_call.1} parent=0 // pred_check_branch
    %1867 = sbr.rel (0) target = $region53
  $region52: #{tpu_custom_call.1} parent=0 // pred_region
    _
  $region53: #{tpu_custom_call.1} parent=0 // pred_fallthru
    _

</llo_original>
